<compile_context>
chip_gen: v6e
topology: v6e:2x2x1
jax: 0.10.0
libtpu: 0.0.40
codegen_flags: <defaults>
</compile_context>

<pallas_src>
import functools

import jax
import jax.numpy as jnp
from jax import lax
from jax.experimental import pallas as pl
from jax.experimental.pallas import tpu as pltpu


# ----------------------------------------------------------------------------
# Tile choosers
# ----------------------------------------------------------------------------
def _pick_seq_tile(n, cap):
    """Largest multiple-of-8 divisor of n that is <= cap (or n itself)."""
    cap = max(8, (cap // 8) * 8)
    if n <= cap:
        return n
    t = cap
    while t >= 8:
        if n % t == 0:
            return t
        t -= 8
    return n


def _pick_row_tile(hs, sr, W, C):
    """Rows-per-step tile for kernel 2: th small-grid rows -> th*sr*W tokens."""
    budget = 4 * 1024 * 1024            # per-step f32 activation budget
    for th in range(hs, 0, -1):
        if hs % th:
            continue
        rows = th * sr * W
        if rows % 8 != 0 and th != hs:  # (8,128) block constraint on out spec
            continue
        if 4 * rows * C * 4 <= budget or th == 1:
            return th
    return hs


# ----------------------------------------------------------------------------
# Kernel 1: flash-style fused qkv projection + attention (+ optional proj)
# ----------------------------------------------------------------------------
def _flash_qkv_attn_kernel(xq_ref, xkv_ref, wq_ref, wk_ref, wv_ref, *rest,
                           num_heads, fuse_proj):
    if fuse_proj:
        wp_ref, bp_ref, o_ref, q_scr, m_scr, l_scr, acc_scr = rest
    else:
        o_ref, q_scr, m_scr, l_scr, acc_scr = rest

    ki = pl.program_id(2)

    @pl.when(ki == 0)
    def _init():
        xq = xq_ref[0].astype(jnp.bfloat16)                       # (tq, C)
        for h in range(num_heads):                                # static, small
            # softmax scale is pre-folded into wq at prep time
            q_scr[h] = jnp.dot(xq, wq_ref[h],
                               preferred_element_type=jnp.float32
                               ).astype(jnp.bfloat16)             # (tq, hd)
        m_scr[...] = jnp.full(m_scr.shape, -jnp.inf, m_scr.dtype)
        l_scr[...] = jnp.zeros(l_scr.shape, l_scr.dtype)
        acc_scr[...] = jnp.zeros(acc_scr.shape, acc_scr.dtype)

    xkv = xkv_ref[0].astype(jnp.bfloat16)                         # (tk, C)
    for h in range(num_heads):
        k_h = jnp.dot(xkv, wk_ref[h],
                      preferred_element_type=jnp.float32).astype(jnp.bfloat16)
        v_h = jnp.dot(xkv, wv_ref[h],
                      preferred_element_type=jnp.float32).astype(jnp.bfloat16)
        # q @ k^T without an explicit transpose (NT contraction on last dims)
        s = lax.dot_general(q_scr[h], k_h, (((1,), (1,)), ((), ())),
                            preferred_element_type=jnp.float32)   # (tq, tk)
        m_prev = m_scr[h]                                         # (tq, 1)
        m_new = jnp.maximum(m_prev, jnp.max(s, axis=-1, keepdims=True))
        alpha = jnp.exp(m_prev - m_new)
        p = jnp.exp(s - m_new)                                    # f32
        l_scr[h] = alpha * l_scr[h] + jnp.sum(p, axis=-1, keepdims=True)
        acc_scr[h] = alpha * acc_scr[h] + jnp.dot(
            p.astype(jnp.bfloat16), v_h, preferred_element_type=jnp.float32)
        m_scr[h] = m_new

    @pl.when(ki == pl.num_programs(2) - 1)
    def _finalize():
        # exact division (approx reciprocal flagged as a parity risk)
        heads = [acc_scr[h] / l_scr[h] for h in range(num_heads)]
        o = jnp.concatenate(heads, axis=-1)                       # (tq, C)
        if fuse_proj:
            o = jnp.dot(o.astype(jnp.bfloat16), wp_ref[...],
                        preferred_element_type=jnp.float32) + bp_ref[...]
        o_ref[0] = o.astype(o_ref.dtype)                          # dense store


def fused_qkv_attention(x, wq, wk, wv, *, w_proj=None, b_proj=None,
                        q_tile=256, kv_tile=256):
    B, Ns, C = x.shape
    nh, _, hd = wq.shape
    tq = _pick_seq_tile(Ns, q_tile)
    tk = _pick_seq_tile(Ns, kv_tile)
    nq, nk = Ns // tq, Ns // tk
    fuse_proj = w_proj is not None

    in_specs = [
        pl.BlockSpec((1, tq, C), lambda b, qi, ki: (b, qi, 0)),   # q rows
        pl.BlockSpec((1, tk, C), lambda b, qi, ki: (b, ki, 0)),   # kv rows
        pl.BlockSpec((nh, C, hd), lambda b, qi, ki: (0, 0, 0)),   # wq (resident)
        pl.BlockSpec((nh, C, hd), lambda b, qi, ki: (0, 0, 0)),   # wk
        pl.BlockSpec((nh, C, hd), lambda b, qi, ki: (0, 0, 0)),   # wv
    ]
    args = [x, x, wq, wk, wv]
    if fuse_proj:
        in_specs += [pl.BlockSpec((C, C), lambda b, qi, ki: (0, 0)),
                     pl.BlockSpec((1, C), lambda b, qi, ki: (0, 0))]
        args += [w_proj, b_proj]

    kernel = functools.partial(_flash_qkv_attn_kernel,
                               num_heads=nh, fuse_proj=fuse_proj)
    return pl.pallas_call(
        kernel,
        out_shape=jax.ShapeDtypeStruct((B, Ns, C), x.dtype),
        grid=(B, nq, nk),
        in_specs=in_specs,
        out_specs=pl.BlockSpec((1, tq, C), lambda b, qi, ki: (b, qi, 0)),
        scratch_shapes=[
            pltpu.VMEM((nh, tq, hd), jnp.bfloat16),   # cached q tiles
            pltpu.VMEM((nh, tq, 1), jnp.float32),     # running max m
            pltpu.VMEM((nh, tq, 1), jnp.float32),     # running denom l
            pltpu.VMEM((nh, tq, hd), jnp.float32),    # running accumulator
        ],
        compiler_params=pltpu.CompilerParams(
            dimension_semantics=("parallel", "parallel", "arbitrary"),
            vmem_limit_bytes=64 * 1024 * 1024),
    )(*args)


# ----------------------------------------------------------------------------
# Kernel 2: depthwise ConvTranspose2d (k == stride == sr) + LayerNorm + proj
# ----------------------------------------------------------------------------
def _convt_ln_proj_kernel(x_ref, wc_ref, bc_ref, g_ref, be_ref, wp_ref, bp_ref,
                          o_ref, *, sr, eps):
    x = x_ref[0].astype(jnp.float32)                 # (th, ws, C)
    th, ws, C = x.shape
    w = wc_ref[...].astype(jnp.float32)              # (sr, sr, C), resident
    bias = bc_ref[...].astype(jnp.float32)           # (1, C)

    # ConvTranspose2d(kernel=stride=sr, groups=C) has no output overlap:
    #   out[i*sr+di, j*sr+dj, c] = x[i, j, c] * w[di, dj, c] + b[c]
    blocks = []
    for di in range(sr):                             # static tiny loop
        y_di = x[:, :, None, :] * w[di] + bias       # (th, ws, sr, C)
        blocks.append(y_di.reshape(th, ws * sr, C))  # (th, W, C), cols j*sr+dj
    y = jnp.stack(blocks, axis=1)                    # (th, sr, W, C)
    rows = th * sr * ws * sr
    y = y.reshape(rows, C)                           # final token order

    # single-pass LayerNorm statistics (sum & sum-of-squares)
    s1 = jnp.sum(y, axis=-1, keepdims=True)
    s2 = jnp.sum(y * y, axis=-1, keepdims=True)
    mu = s1 * (1.0 / C)
    var = s2 * (1.0 / C) - mu * mu
    yn = (y - mu) * lax.rsqrt(var + eps)
    yn = yn * g_ref[...] + be_ref[...]

    out = jnp.dot(yn.astype(jnp.bfloat16), wp_ref[...],
                  preferred_element_type=jnp.float32) + bp_ref[...]
    o_ref[0] = out.astype(o_ref.dtype)               # single dense store


def fused_convt_ln_proj(x_small, w_convt, b_convt, gamma, beta, w_proj, b_proj,
                        *, sr, eps=1e-5):
    # x_small: (B, hs, ws, C); w_convt: (sr, sr, C) f32; w_proj: (C, C) bf16
    B, hs, ws, C = x_small.shape
    W_full = ws * sr
    th = _pick_row_tile(hs, sr, W_full, C)
    rows = th * sr * W_full
    kernel = functools.partial(_convt_ln_proj_kernel, sr=sr, eps=eps)
    return pl.pallas_call(
        kernel,
        out_shape=jax.ShapeDtypeStruct((B, hs * sr * W_full, C), x_small.dtype),
        grid=(B, hs // th),
        in_specs=[
            pl.BlockSpec((1, th, ws, C), lambda b, r: (b, r, 0, 0)),
            pl.BlockSpec((sr, sr, C), lambda b, r: (0, 0, 0)),    # resident
            pl.BlockSpec((1, C), lambda b, r: (0, 0)),
            pl.BlockSpec((1, C), lambda b, r: (0, 0)),
            pl.BlockSpec((1, C), lambda b, r: (0, 0)),
            pl.BlockSpec((C, C), lambda b, r: (0, 0)),
            pl.BlockSpec((1, C), lambda b, r: (0, 0)),
        ],
        out_specs=pl.BlockSpec((1, rows, C), lambda b, r: (b, r, 0)),
        compiler_params=pltpu.CompilerParams(
            dimension_semantics=("parallel", "parallel"),
            vmem_limit_bytes=64 * 1024 * 1024),
    )(x_small, w_convt, b_convt, gamma, beta, w_proj, b_proj)


# ----------------------------------------------------------------------------
# Parameters: synthetic init (PyTorch layout) + one-time kernel repack
# ----------------------------------------------------------------------------
def init_params(key, dim, sr_ratio):
    ks = jax.random.split(key, 5)
    std = 0.02
    params = {
        # Linear stored as (in, out); qkv_bias=False as in the module default.
        "w_qkv": std * jax.random.normal(ks[0], (dim, 3 * dim), jnp.float32),
        "w_proj": std * jax.random.normal(ks[1], (dim, dim), jnp.float32),
        "b_proj": std * jax.random.normal(ks[2], (dim,), jnp.float32),
    }
    if sr_ratio > 1:
        # ConvTranspose2d(dim, dim, sr, stride=sr, groups=dim) weight,
        # stored channel-last as (sr, sr, dim).
        params["w_convt"] = std * jax.random.normal(
            ks[3], (sr_ratio, sr_ratio, dim), jnp.float32)
        params["b_convt"] = std * jax.random.normal(ks[4], (dim,), jnp.float32)
        params["ln_gamma"] = jnp.ones((dim,), jnp.float32)
        params["ln_beta"] = jnp.zeros((dim,), jnp.float32)
    return params


def prepare_params(params, *, num_heads, sr_ratio, qk_scale=None):
    """One-time host repack: head-major bf16 qkv weights with scale folded
    into Q, bf16 projection weight, (1, C)-shaped f32 vectors."""
    C = params["w_qkv"].shape[0]
    hd = C // num_heads
    scale = qk_scale if qk_scale is not None else hd ** (-0.5)

    def head_major(w):                                     # (C, C) -> (nh, C, hd)
        return jnp.transpose(w.reshape(C, num_heads, hd), (1, 0, 2))

    wqkv = params["w_qkv"]
    prep = {
        "wq": (head_major(wqkv[:, :C]) * scale).astype(jnp.bfloat16),
        "wk": head_major(wqkv[:, C:2 * C]).astype(jnp.bfloat16),
        "wv": head_major(wqkv[:, 2 * C:]).astype(jnp.bfloat16),
        "w_proj": params["w_proj"].astype(jnp.bfloat16),
        "b_proj": params["b_proj"].reshape(1, C).astype(jnp.float32),
    }
    if sr_ratio > 1:
        prep["w_convt"] = params["w_convt"].astype(jnp.float32)
        prep["b_convt"] = params["b_convt"].reshape(1, C).astype(jnp.float32)
        prep["ln_gamma"] = params["ln_gamma"].reshape(1, C).astype(jnp.float32)
        prep["ln_beta"] = params["ln_beta"].reshape(1, C).astype(jnp.float32)
    return prep


def global_sparse_attn(prep, x, H, W, *, sr_ratio, q_tile=256, kv_tile=256):
    B, N, C = x.shape
    if sr_ratio > 1:
        # AvgPool2d(kernel_size=1, stride=sr) == strided spatial subsampling
        xs = x.reshape(B, H, W, C)[:, ::sr_ratio, ::sr_ratio, :]
        hs, ws = xs.shape[1], xs.shape[2]
        att = fused_qkv_attention(xs.reshape(B, hs * ws, C),
                                  prep["wq"], prep["wk"], prep["wv"],
                                  q_tile=q_tile, kv_tile=kv_tile)
        # TODO(synk): fuse this stage into kernel 1's finalize to drop the
        #             (B, Ns, C) HBM round trip (memory-bound on v5e/v6e).
        return fused_convt_ln_proj(att.reshape(B, hs, ws, C),
                                   prep["w_convt"], prep["b_convt"],
                                   prep["ln_gamma"], prep["ln_beta"],
                                   prep["w_proj"], prep["b_proj"],
                                   sr=sr_ratio)
    # sr_ratio == 1: qkv + attention + output projection fused in one call
    return fused_qkv_attention(x, prep["wq"], prep["wk"], prep["wv"],
                               w_proj=prep["w_proj"], b_proj=prep["b_proj"],
                               q_tile=q_tile, kv_tile=kv_tile)


# ----------------------------------------------------------------------------
# Pure-JAX f32 reference (mirrors the PyTorch forward) for a sanity check
# ----------------------------------------------------------------------------
def reference(params, x, H, W, *, num_heads, sr_ratio):
    B, N, C = x.shape
    hd = C // num_heads
    scale = hd ** (-0.5)
    if sr_ratio > 1:
        xs = x.reshape(B, H, W, C)[:, ::sr_ratio, ::sr_ratio, :]
        hs, ws = xs.shape[1], xs.shape[2]
        xs = xs.reshape(B, -1, C)
    else:
        xs, hs, ws = x, H, W
    Ns = xs.shape[1]
    qkv = xs @ params["w_qkv"]
    qkv = qkv.reshape(B, Ns, 3, num_heads, hd).transpose(2, 0, 3, 1, 4)
    q, k, v = qkv[0], qkv[1], qkv[2]
    attn = jnp.einsum("bhqd,bhkd->bhqk", q, k) * scale
    attn = jax.nn.softmax(attn, axis=-1)
    o = jnp.einsum("bhqk,bhkd->bhqd", attn, v).transpose(0, 2, 1, 3).reshape(B, Ns, C)
    if sr_ratio > 1:
        xsm = o.reshape(B, hs, ws, C)
        w = params["w_convt"]                                    # (sr, sr, C)
        o6 = xsm[:, :, :, None, None, :] * w[None, None, None] + params["b_convt"]
        o = o6.transpose(0, 1, 3, 2, 4, 5).reshape(B, hs * sr_ratio,
                                                   ws * sr_ratio, C)
        o = o.reshape(B, -1, C)
        mu = jnp.mean(o, axis=-1, keepdims=True)
        var = jnp.mean(jnp.square(o - mu), axis=-1, keepdims=True)
        o = (o - mu) / jnp.sqrt(var + 1e-5) * params["ln_gamma"] + params["ln_beta"]
    return o @ params["w_proj"] + params["b_proj"]


if __name__ == "__main__":
    key = jax.random.PRNGKey(0)
    kx, kp1, kp2 = jax.random.split(key, 3)

    B, C, H, W = 2, 32, 8, 8
    num_heads = 4
    N = H * W
    x = jax.random.normal(kx, (B, N, C), jnp.float32)

    # Tolerance accounts for bf16 MXU operands vs an all-f32 reference.
    TOL = 2e-2

    # sr_ratio = 2 path: subsample -> flash qkv+attn -> fused convT+LN+proj
    sr = 2
    params = init_params(kp1, C, sr)
    prep = prepare_params(params, num_heads=num_heads, sr_ratio=sr)
    out = jax.block_until_ready(
        global_sparse_attn(prep, x, H, W, sr_ratio=sr, q_tile=32, kv_tile=32))
    ref = reference(params, x, H, W, num_heads=num_heads, sr_ratio=sr)
    assert out.shape == (B, N, C)
    err = float(jnp.max(jnp.abs(out - ref)))
    assert err < TOL, err

    # sr_ratio = 1 path: fully fused qkv+attention+proj; small tiles so the
    # multi-step flash accumulation (2 q-tiles x 2 kv-tiles) is exercised.
    params1 = init_params(kp2, C, 1)
    prep1 = prepare_params(params1, num_heads=num_heads, sr_ratio=1)
    out1 = jax.block_until_ready(
        global_sparse_attn(prep1, x, H, W, sr_ratio=1, q_tile=32, kv_tile=32))
    ref1 = reference(params1, x, H, W, num_heads=num_heads, sr_ratio=1)
    assert out1.shape == (B, N, C)
    err1 = float(jnp.max(jnp.abs(out1 - ref1)))
    assert err1 < TOL, err1

    print("KERNEL_OK")
</pallas_src>

<mosaic_0001>
module attributes {stable_mosaic.version = 11 : i64} {
  func.func @_flash_qkv_attn_kernel(%arg0: i32, %arg1: i32, %arg2: i32, %arg3: memref<1x16x32xf32, #tpu.memory_space<vmem>>, %arg4: memref<1x16x32xf32, #tpu.memory_space<vmem>>, %arg5: memref<4x32x8xbf16, #tpu.memory_space<vmem>>, %arg6: memref<4x32x8xbf16, #tpu.memory_space<vmem>>, %arg7: memref<4x32x8xbf16, #tpu.memory_space<vmem>>, %arg8: memref<1x16x32xf32, #tpu.memory_space<vmem>>, %arg9: memref<4x16x8xbf16, #tpu.memory_space<vmem>>, %arg10: memref<4x16x1xf32, #tpu.memory_space<vmem>>, %arg11: memref<4x16x1xf32, #tpu.memory_space<vmem>>, %arg12: memref<4x16x8xf32, #tpu.memory_space<vmem>>) attributes {dimension_semantics = [#tpu.dimension_semantics<parallel>, #tpu.dimension_semantics<parallel>, #tpu.dimension_semantics<arbitrary>], iteration_bounds = array<i64: 2, 1, 1>, scalar_prefetch = 0 : i64, scratch_operands = 4 : i64, tpu.core_type = #tpu.core_type<tc>, window_params = [{transform_indices = @transform_0, window_bounds = array<i64: 1, 16, 32>}, {transform_indices = @transform_1, window_bounds = array<i64: 1, 16, 32>}, {pipeline_mode = #tpu.pipeline_mode<synchronous>, transform_indices = @transform_2, window_bounds = array<i64: 4, 32, 8>}, {pipeline_mode = #tpu.pipeline_mode<synchronous>, transform_indices = @transform_3, window_bounds = array<i64: 4, 32, 8>}, {pipeline_mode = #tpu.pipeline_mode<synchronous>, transform_indices = @transform_4, window_bounds = array<i64: 4, 32, 8>}, {transform_indices = @transform_5, window_bounds = array<i64: 1, 16, 32>}]} {
    %c0_i32 = arith.constant 0 : i32
    %0 = arith.cmpi eq, %arg2, %c0_i32 : i32
    %1 = arith.extui %0 : i1 to i32
    %c0_i32_0 = arith.constant 0 : i32
    %2 = arith.cmpi ne, %1, %c0_i32_0 : i32
    scf.if %2 {
      %c0_133 = arith.constant 0 : index
      %c0_134 = arith.constant 0 : index
      %c0_135 = arith.constant 0 : index
      %181 = vector.load %arg3[%c0_133, %c0_134, %c0_135] : memref<1x16x32xf32, #tpu.memory_space<vmem>>, vector<1x16x32xf32>
      %182 = vector.shape_cast %181 : vector<1x16x32xf32> to vector<16x32xf32>
      %183 = arith.truncf %182 : vector<16x32xf32> to vector<16x32xbf16>
      %c0_136 = arith.constant 0 : index
      %c0_137 = arith.constant 0 : index
      %c0_138 = arith.constant 0 : index
      %184 = vector.load %arg5[%c0_136, %c0_137, %c0_138] : memref<4x32x8xbf16, #tpu.memory_space<vmem>>, vector<1x32x8xbf16>
      %185 = vector.shape_cast %184 : vector<1x32x8xbf16> to vector<32x8xbf16>
      %cst_139 = arith.constant dense<0.000000e+00> : vector<16x8xf32>
      %186 = tpu.matmul %183, %185, %cst_139 {dimension_numbers = #tpu.dot_dimension_numbers<[1], [0], [0], [1], [0, 0, 1, 1], [], []>} : vector<16x32xbf16>, vector<32x8xbf16>, vector<16x8xf32> -> vector<16x8xf32>
      %187 = arith.truncf %186 : vector<16x8xf32> to vector<16x8xbf16>
      %c0_140 = arith.constant 0 : index
      %c0_141 = arith.constant 0 : index
      %c0_142 = arith.constant 0 : index
      %188 = vector.load %arg9[%c0_140, %c0_141, %c0_142] : memref<4x16x8xbf16, #tpu.memory_space<vmem>>, vector<1x16x8xbf16>
      %189 = vector.shape_cast %188 : vector<1x16x8xbf16> to vector<16x8xbf16>
      %190 = vector.shape_cast %187 : vector<16x8xbf16> to vector<1x16x8xbf16>
      tpu.vector_store %arg9[%c0_140, %c0_141, %c0_142], %190 {strides = array<i32>} : memref<4x16x8xbf16, #tpu.memory_space<vmem>>, vector<1x16x8xbf16>,
      %c1_143 = arith.constant 1 : index
      %c0_144 = arith.constant 0 : index
      %c0_145 = arith.constant 0 : index
      %191 = vector.load %arg5[%c1_143, %c0_144, %c0_145] : memref<4x32x8xbf16, #tpu.memory_space<vmem>>, vector<1x32x8xbf16>
      %192 = vector.shape_cast %191 : vector<1x32x8xbf16> to vector<32x8xbf16>
      %cst_146 = arith.constant dense<0.000000e+00> : vector<16x8xf32>
      %193 = tpu.matmul %183, %192, %cst_146 {dimension_numbers = #tpu.dot_dimension_numbers<[1], [0], [0], [1], [0, 0, 1, 1], [], []>} : vector<16x32xbf16>, vector<32x8xbf16>, vector<16x8xf32> -> vector<16x8xf32>
      %194 = arith.truncf %193 : vector<16x8xf32> to vector<16x8xbf16>
      %c1_147 = arith.constant 1 : index
      %c0_148 = arith.constant 0 : index
      %c0_149 = arith.constant 0 : index
      %195 = vector.load %arg9[%c1_147, %c0_148, %c0_149] : memref<4x16x8xbf16, #tpu.memory_space<vmem>>, vector<1x16x8xbf16>
      %196 = vector.shape_cast %195 : vector<1x16x8xbf16> to vector<16x8xbf16>
      %197 = vector.shape_cast %194 : vector<16x8xbf16> to vector<1x16x8xbf16>
      tpu.vector_store %arg9[%c1_147, %c0_148, %c0_149], %197 {strides = array<i32>} : memref<4x16x8xbf16, #tpu.memory_space<vmem>>, vector<1x16x8xbf16>,
      %c2_150 = arith.constant 2 : index
      %c0_151 = arith.constant 0 : index
      %c0_152 = arith.constant 0 : index
      %198 = vector.load %arg5[%c2_150, %c0_151, %c0_152] : memref<4x32x8xbf16, #tpu.memory_space<vmem>>, vector<1x32x8xbf16>
      %199 = vector.shape_cast %198 : vector<1x32x8xbf16> to vector<32x8xbf16>
      %cst_153 = arith.constant dense<0.000000e+00> : vector<16x8xf32>
      %200 = tpu.matmul %183, %199, %cst_153 {dimension_numbers = #tpu.dot_dimension_numbers<[1], [0], [0], [1], [0, 0, 1, 1], [], []>} : vector<16x32xbf16>, vector<32x8xbf16>, vector<16x8xf32> -> vector<16x8xf32>
      %201 = arith.truncf %200 : vector<16x8xf32> to vector<16x8xbf16>
      %c2_154 = arith.constant 2 : index
      %c0_155 = arith.constant 0 : index
      %c0_156 = arith.constant 0 : index
      %202 = vector.load %arg9[%c2_154, %c0_155, %c0_156] : memref<4x16x8xbf16, #tpu.memory_space<vmem>>, vector<1x16x8xbf16>
      %203 = vector.shape_cast %202 : vector<1x16x8xbf16> to vector<16x8xbf16>
      %204 = vector.shape_cast %201 : vector<16x8xbf16> to vector<1x16x8xbf16>
      tpu.vector_store %arg9[%c2_154, %c0_155, %c0_156], %204 {strides = array<i32>} : memref<4x16x8xbf16, #tpu.memory_space<vmem>>, vector<1x16x8xbf16>,
      %c3_157 = arith.constant 3 : index
      %c0_158 = arith.constant 0 : index
      %c0_159 = arith.constant 0 : index
      %205 = vector.load %arg5[%c3_157, %c0_158, %c0_159] : memref<4x32x8xbf16, #tpu.memory_space<vmem>>, vector<1x32x8xbf16>
      %206 = vector.shape_cast %205 : vector<1x32x8xbf16> to vector<32x8xbf16>
      %cst_160 = arith.constant dense<0.000000e+00> : vector<16x8xf32>
      %207 = tpu.matmul %183, %206, %cst_160 {dimension_numbers = #tpu.dot_dimension_numbers<[1], [0], [0], [1], [0, 0, 1, 1], [], []>} : vector<16x32xbf16>, vector<32x8xbf16>, vector<16x8xf32> -> vector<16x8xf32>
      %208 = arith.truncf %207 : vector<16x8xf32> to vector<16x8xbf16>
      %c3_161 = arith.constant 3 : index
      %c0_162 = arith.constant 0 : index
      %c0_163 = arith.constant 0 : index
      %209 = vector.load %arg9[%c3_161, %c0_162, %c0_163] : memref<4x16x8xbf16, #tpu.memory_space<vmem>>, vector<1x16x8xbf16>
      %210 = vector.shape_cast %209 : vector<1x16x8xbf16> to vector<16x8xbf16>
      %211 = vector.shape_cast %208 : vector<16x8xbf16> to vector<1x16x8xbf16>
      tpu.vector_store %arg9[%c3_161, %c0_162, %c0_163], %211 {strides = array<i32>} : memref<4x16x8xbf16, #tpu.memory_space<vmem>>, vector<1x16x8xbf16>,
      %cst_164 = arith.constant 0xFF800000 : f32
      %212 = vector.broadcast %cst_164 : f32 to vector<4x16x1xf32>
      %c0_165 = arith.constant 0 : index
      %c0_166 = arith.constant 0 : index
      %c0_167 = arith.constant 0 : index
      %213 = vector.load %arg10[%c0_165, %c0_166, %c0_167] : memref<4x16x1xf32, #tpu.memory_space<vmem>>, vector<4x16x1xf32>
      tpu.vector_store %arg10[%c0_165, %c0_166, %c0_167], %212 {strides = array<i32>} : memref<4x16x1xf32, #tpu.memory_space<vmem>>, vector<4x16x1xf32>,
      %cst_168 = arith.constant 0.000000e+00 : f32
      %214 = vector.broadcast %cst_168 : f32 to vector<4x16x1xf32>
      %c0_169 = arith.constant 0 : index
      %c0_170 = arith.constant 0 : index
      %c0_171 = arith.constant 0 : index
      %215 = vector.load %arg11[%c0_169, %c0_170, %c0_171] : memref<4x16x1xf32, #tpu.memory_space<vmem>>, vector<4x16x1xf32>
      tpu.vector_store %arg11[%c0_169, %c0_170, %c0_171], %214 {strides = array<i32>} : memref<4x16x1xf32, #tpu.memory_space<vmem>>, vector<4x16x1xf32>,
      %cst_172 = arith.constant 0.000000e+00 : f32
      %216 = vector.broadcast %cst_172 : f32 to vector<4x16x8xf32>
      %c0_173 = arith.constant 0 : index
      %c0_174 = arith.constant 0 : index
      %c0_175 = arith.constant 0 : index
      %217 = vector.load %arg12[%c0_173, %c0_174, %c0_175] : memref<4x16x8xf32, #tpu.memory_space<vmem>>, vector<4x16x8xf32>
      tpu.vector_store %arg12[%c0_173, %c0_174, %c0_175], %216 {strides = array<i32>} : memref<4x16x8xf32, #tpu.memory_space<vmem>>, vector<4x16x8xf32>,
    } else {
    }
    %c0 = arith.constant 0 : index
    %c0_1 = arith.constant 0 : index
    %c0_2 = arith.constant 0 : index
    %3 = vector.load %arg4[%c0, %c0_1, %c0_2] : memref<1x16x32xf32, #tpu.memory_space<vmem>>, vector<1x16x32xf32>
    %4 = vector.shape_cast %3 : vector<1x16x32xf32> to vector<16x32xf32>
    %5 = arith.truncf %4 : vector<16x32xf32> to vector<16x32xbf16>
    %c0_3 = arith.constant 0 : index
    %c0_4 = arith.constant 0 : index
    %c0_5 = arith.constant 0 : index
    %6 = vector.load %arg6[%c0_3, %c0_4, %c0_5] : memref<4x32x8xbf16, #tpu.memory_space<vmem>>, vector<1x32x8xbf16>
    %7 = vector.shape_cast %6 : vector<1x32x8xbf16> to vector<32x8xbf16>
    %cst = arith.constant dense<0.000000e+00> : vector<16x8xf32>
    %8 = tpu.matmul %5, %7, %cst {dimension_numbers = #tpu.dot_dimension_numbers<[1], [0], [0], [1], [0, 0, 1, 1], [], []>} : vector<16x32xbf16>, vector<32x8xbf16>, vector<16x8xf32> -> vector<16x8xf32>
    %9 = arith.truncf %8 : vector<16x8xf32> to vector<16x8xbf16>
    %c0_6 = arith.constant 0 : index
    %c0_7 = arith.constant 0 : index
    %c0_8 = arith.constant 0 : index
    %10 = vector.load %arg7[%c0_6, %c0_7, %c0_8] : memref<4x32x8xbf16, #tpu.memory_space<vmem>>, vector<1x32x8xbf16>
    %11 = vector.shape_cast %10 : vector<1x32x8xbf16> to vector<32x8xbf16>
    %cst_9 = arith.constant dense<0.000000e+00> : vector<16x8xf32>
    %12 = tpu.matmul %5, %11, %cst_9 {dimension_numbers = #tpu.dot_dimension_numbers<[1], [0], [0], [1], [0, 0, 1, 1], [], []>} : vector<16x32xbf16>, vector<32x8xbf16>, vector<16x8xf32> -> vector<16x8xf32>
    %13 = arith.truncf %12 : vector<16x8xf32> to vector<16x8xbf16>
    %c0_10 = arith.constant 0 : index
    %c0_11 = arith.constant 0 : index
    %c0_12 = arith.constant 0 : index
    %14 = vector.load %arg9[%c0_10, %c0_11, %c0_12] : memref<4x16x8xbf16, #tpu.memory_space<vmem>>, vector<1x16x8xbf16>
    %15 = vector.shape_cast %14 : vector<1x16x8xbf16> to vector<16x8xbf16>
    %cst_13 = arith.constant dense<0.000000e+00> : vector<16x16xf32>
    %16 = tpu.matmul %15, %9, %cst_13 {dimension_numbers = #tpu.dot_dimension_numbers<[1], [1], [0], [0], [0, 0, 1, 0], [], []>} : vector<16x8xbf16>, vector<16x8xbf16>, vector<16x16xf32> -> vector<16x16xf32>
    %c0_14 = arith.constant 0 : index
    %c0_15 = arith.constant 0 : index
    %c0_16 = arith.constant 0 : index
    %17 = vector.load %arg10[%c0_14, %c0_15, %c0_16] : memref<4x16x1xf32, #tpu.memory_space<vmem>>, vector<1x16x1xf32>
    %18 = vector.shape_cast %17 : vector<1x16x1xf32> to vector<16x1xf32>
    %cst_17 = arith.constant dense<0xFF800000> : vector<16xf32>
    %19 = vector.multi_reduction <maximumf>, %16, %cst_17 [1] : vector<16x16xf32> to vector<16xf32>
    %20 = vector.shape_cast %19 : vector<16xf32> to vector<16x1xf32>
    %21 = arith.maximumf %18, %20 : vector<16x1xf32>
    %22 = arith.subf %18, %21 : vector<16x1xf32>
    %23 = math.exp %22 : vector<16x1xf32>
    %24 = vector.broadcast %21 : vector<16x1xf32> to vector<16x16xf32>
    %25 = arith.subf %16, %24 : vector<16x16xf32>
    %26 = math.exp %25 : vector<16x16xf32>
    %c0_18 = arith.constant 0 : index
    %c0_19 = arith.constant 0 : index
    %c0_20 = arith.constant 0 : index
    %27 = vector.load %arg11[%c0_18, %c0_19, %c0_20] : memref<4x16x1xf32, #tpu.memory_space<vmem>>, vector<1x16x1xf32>
    %28 = vector.shape_cast %27 : vector<1x16x1xf32> to vector<16x1xf32>
    %29 = arith.mulf %23, %28 : vector<16x1xf32>
    %cst_21 = arith.constant dense<0.000000e+00> : vector<16xf32>
    %30 = vector.multi_reduction <add>, %26, %cst_21 [1] : vector<16x16xf32> to vector<16xf32>
    %31 = vector.shape_cast %30 : vector<16xf32> to vector<16x1xf32>
    %32 = arith.addf %29, %31 : vector<16x1xf32>
    %c0_22 = arith.constant 0 : index
    %c0_23 = arith.constant 0 : index
    %c0_24 = arith.constant 0 : index
    %33 = vector.load %arg11[%c0_22, %c0_23, %c0_24] : memref<4x16x1xf32, #tpu.memory_space<vmem>>, vector<1x16x1xf32>
    %34 = vector.shape_cast %33 : vector<1x16x1xf32> to vector<16x1xf32>
    %35 = vector.shape_cast %32 : vector<16x1xf32> to vector<1x16x1xf32>
    tpu.vector_store %arg11[%c0_22, %c0_23, %c0_24], %35 {strides = array<i32>} : memref<4x16x1xf32, #tpu.memory_space<vmem>>, vector<1x16x1xf32>,
    %c0_25 = arith.constant 0 : index
    %c0_26 = arith.constant 0 : index
    %c0_27 = arith.constant 0 : index
    %36 = vector.load %arg12[%c0_25, %c0_26, %c0_27] : memref<4x16x8xf32, #tpu.memory_space<vmem>>, vector<1x16x8xf32>
    %37 = vector.shape_cast %36 : vector<1x16x8xf32> to vector<16x8xf32>
    %38 = vector.broadcast %23 : vector<16x1xf32> to vector<16x8xf32>
    %39 = arith.mulf %38, %37 : vector<16x8xf32>
    %40 = arith.truncf %26 : vector<16x16xf32> to vector<16x16xbf16>
    %cst_28 = arith.constant dense<0.000000e+00> : vector<16x8xf32>
    %41 = tpu.matmul %40, %13, %cst_28 {dimension_numbers = #tpu.dot_dimension_numbers<[1], [0], [0], [1], [0, 0, 1, 1], [], []>} : vector<16x16xbf16>, vector<16x8xbf16>, vector<16x8xf32> -> vector<16x8xf32>
    %42 = arith.addf %39, %41 : vector<16x8xf32>
    %c0_29 = arith.constant 0 : index
    %c0_30 = arith.constant 0 : index
    %c0_31 = arith.constant 0 : index
    %43 = vector.load %arg12[%c0_29, %c0_30, %c0_31] : memref<4x16x8xf32, #tpu.memory_space<vmem>>, vector<1x16x8xf32>
    %44 = vector.shape_cast %43 : vector<1x16x8xf32> to vector<16x8xf32>
    %45 = vector.shape_cast %42 : vector<16x8xf32> to vector<1x16x8xf32>
    tpu.vector_store %arg12[%c0_29, %c0_30, %c0_31], %45 {strides = array<i32>} : memref<4x16x8xf32, #tpu.memory_space<vmem>>, vector<1x16x8xf32>,
    %c0_32 = arith.constant 0 : index
    %c0_33 = arith.constant 0 : index
    %c0_34 = arith.constant 0 : index
    %46 = vector.load %arg10[%c0_32, %c0_33, %c0_34] : memref<4x16x1xf32, #tpu.memory_space<vmem>>, vector<1x16x1xf32>
    %47 = vector.shape_cast %46 : vector<1x16x1xf32> to vector<16x1xf32>
    %48 = vector.shape_cast %21 : vector<16x1xf32> to vector<1x16x1xf32>
    tpu.vector_store %arg10[%c0_32, %c0_33, %c0_34], %48 {strides = array<i32>} : memref<4x16x1xf32, #tpu.memory_space<vmem>>, vector<1x16x1xf32>,
    %c1 = arith.constant 1 : index
    %c0_35 = arith.constant 0 : index
    %c0_36 = arith.constant 0 : index
    %49 = vector.load %arg6[%c1, %c0_35, %c0_36] : memref<4x32x8xbf16, #tpu.memory_space<vmem>>, vector<1x32x8xbf16>
    %50 = vector.shape_cast %49 : vector<1x32x8xbf16> to vector<32x8xbf16>
    %cst_37 = arith.constant dense<0.000000e+00> : vector<16x8xf32>
    %51 = tpu.matmul %5, %50, %cst_37 {dimension_numbers = #tpu.dot_dimension_numbers<[1], [0], [0], [1], [0, 0, 1, 1], [], []>} : vector<16x32xbf16>, vector<32x8xbf16>, vector<16x8xf32> -> vector<16x8xf32>
    %52 = arith.truncf %51 : vector<16x8xf32> to vector<16x8xbf16>
    %c1_38 = arith.constant 1 : index
    %c0_39 = arith.constant 0 : index
    %c0_40 = arith.constant 0 : index
    %53 = vector.load %arg7[%c1_38, %c0_39, %c0_40] : memref<4x32x8xbf16, #tpu.memory_space<vmem>>, vector<1x32x8xbf16>
    %54 = vector.shape_cast %53 : vector<1x32x8xbf16> to vector<32x8xbf16>
    %cst_41 = arith.constant dense<0.000000e+00> : vector<16x8xf32>
    %55 = tpu.matmul %5, %54, %cst_41 {dimension_numbers = #tpu.dot_dimension_numbers<[1], [0], [0], [1], [0, 0, 1, 1], [], []>} : vector<16x32xbf16>, vector<32x8xbf16>, vector<16x8xf32> -> vector<16x8xf32>
    %56 = arith.truncf %55 : vector<16x8xf32> to vector<16x8xbf16>
    %c1_42 = arith.constant 1 : index
    %c0_43 = arith.constant 0 : index
    %c0_44 = arith.constant 0 : index
    %57 = vector.load %arg9[%c1_42, %c0_43, %c0_44] : memref<4x16x8xbf16, #tpu.memory_space<vmem>>, vector<1x16x8xbf16>
    %58 = vector.shape_cast %57 : vector<1x16x8xbf16> to vector<16x8xbf16>
    %cst_45 = arith.constant dense<0.000000e+00> : vector<16x16xf32>
    %59 = tpu.matmul %58, %52, %cst_45 {dimension_numbers = #tpu.dot_dimension_numbers<[1], [1], [0], [0], [0, 0, 1, 0], [], []>} : vector<16x8xbf16>, vector<16x8xbf16>, vector<16x16xf32> -> vector<16x16xf32>
    %c1_46 = arith.constant 1 : index
    %c0_47 = arith.constant 0 : index
    %c0_48 = arith.constant 0 : index
    %60 = vector.load %arg10[%c1_46, %c0_47, %c0_48] : memref<4x16x1xf32, #tpu.memory_space<vmem>>, vector<1x16x1xf32>
    %61 = vector.shape_cast %60 : vector<1x16x1xf32> to vector<16x1xf32>
    %cst_49 = arith.constant dense<0xFF800000> : vector<16xf32>
    %62 = vector.multi_reduction <maximumf>, %59, %cst_49 [1] : vector<16x16xf32> to vector<16xf32>
    %63 = vector.shape_cast %62 : vector<16xf32> to vector<16x1xf32>
    %64 = arith.maximumf %61, %63 : vector<16x1xf32>
    %65 = arith.subf %61, %64 : vector<16x1xf32>
    %66 = math.exp %65 : vector<16x1xf32>
    %67 = vector.broadcast %64 : vector<16x1xf32> to vector<16x16xf32>
    %68 = arith.subf %59, %67 : vector<16x16xf32>
    %69 = math.exp %68 : vector<16x16xf32>
    %c1_50 = arith.constant 1 : index
    %c0_51 = arith.constant 0 : index
    %c0_52 = arith.constant 0 : index
    %70 = vector.load %arg11[%c1_50, %c0_51, %c0_52] : memref<4x16x1xf32, #tpu.memory_space<vmem>>, vector<1x16x1xf32>
    %71 = vector.shape_cast %70 : vector<1x16x1xf32> to vector<16x1xf32>
    %72 = arith.mulf %66, %71 : vector<16x1xf32>
    %cst_53 = arith.constant dense<0.000000e+00> : vector<16xf32>
    %73 = vector.multi_reduction <add>, %69, %cst_53 [1] : vector<16x16xf32> to vector<16xf32>
    %74 = vector.shape_cast %73 : vector<16xf32> to vector<16x1xf32>
    %75 = arith.addf %72, %74 : vector<16x1xf32>
    %c1_54 = arith.constant 1 : index
    %c0_55 = arith.constant 0 : index
    %c0_56 = arith.constant 0 : index
    %76 = vector.load %arg11[%c1_54, %c0_55, %c0_56] : memref<4x16x1xf32, #tpu.memory_space<vmem>>, vector<1x16x1xf32>
    %77 = vector.shape_cast %76 : vector<1x16x1xf32> to vector<16x1xf32>
    %78 = vector.shape_cast %75 : vector<16x1xf32> to vector<1x16x1xf32>
    tpu.vector_store %arg11[%c1_54, %c0_55, %c0_56], %78 {strides = array<i32>} : memref<4x16x1xf32, #tpu.memory_space<vmem>>, vector<1x16x1xf32>,
    %c1_57 = arith.constant 1 : index
    %c0_58 = arith.constant 0 : index
    %c0_59 = arith.constant 0 : index
    %79 = vector.load %arg12[%c1_57, %c0_58, %c0_59] : memref<4x16x8xf32, #tpu.memory_space<vmem>>, vector<1x16x8xf32>
    %80 = vector.shape_cast %79 : vector<1x16x8xf32> to vector<16x8xf32>
    %81 = vector.broadcast %66 : vector<16x1xf32> to vector<16x8xf32>
    %82 = arith.mulf %81, %80 : vector<16x8xf32>
    %83 = arith.truncf %69 : vector<16x16xf32> to vector<16x16xbf16>
    %cst_60 = arith.constant dense<0.000000e+00> : vector<16x8xf32>
    %84 = tpu.matmul %83, %56, %cst_60 {dimension_numbers = #tpu.dot_dimension_numbers<[1], [0], [0], [1], [0, 0, 1, 1], [], []>} : vector<16x16xbf16>, vector<16x8xbf16>, vector<16x8xf32> -> vector<16x8xf32>
    %85 = arith.addf %82, %84 : vector<16x8xf32>
    %c1_61 = arith.constant 1 : index
    %c0_62 = arith.constant 0 : index
    %c0_63 = arith.constant 0 : index
    %86 = vector.load %arg12[%c1_61, %c0_62, %c0_63] : memref<4x16x8xf32, #tpu.memory_space<vmem>>, vector<1x16x8xf32>
    %87 = vector.shape_cast %86 : vector<1x16x8xf32> to vector<16x8xf32>
    %88 = vector.shape_cast %85 : vector<16x8xf32> to vector<1x16x8xf32>
    tpu.vector_store %arg12[%c1_61, %c0_62, %c0_63], %88 {strides = array<i32>} : memref<4x16x8xf32, #tpu.memory_space<vmem>>, vector<1x16x8xf32>,
    %c1_64 = arith.constant 1 : index
    %c0_65 = arith.constant 0 : index
    %c0_66 = arith.constant 0 : index
    %89 = vector.load %arg10[%c1_64, %c0_65, %c0_66] : memref<4x16x1xf32, #tpu.memory_space<vmem>>, vector<1x16x1xf32>
    %90 = vector.shape_cast %89 : vector<1x16x1xf32> to vector<16x1xf32>
    %91 = vector.shape_cast %64 : vector<16x1xf32> to vector<1x16x1xf32>
    tpu.vector_store %arg10[%c1_64, %c0_65, %c0_66], %91 {strides = array<i32>} : memref<4x16x1xf32, #tpu.memory_space<vmem>>, vector<1x16x1xf32>,
    %c2 = arith.constant 2 : index
    %c0_67 = arith.constant 0 : index
    %c0_68 = arith.constant 0 : index
    %92 = vector.load %arg6[%c2, %c0_67, %c0_68] : memref<4x32x8xbf16, #tpu.memory_space<vmem>>, vector<1x32x8xbf16>
    %93 = vector.shape_cast %92 : vector<1x32x8xbf16> to vector<32x8xbf16>
    %cst_69 = arith.constant dense<0.000000e+00> : vector<16x8xf32>
    %94 = tpu.matmul %5, %93, %cst_69 {dimension_numbers = #tpu.dot_dimension_numbers<[1], [0], [0], [1], [0, 0, 1, 1], [], []>} : vector<16x32xbf16>, vector<32x8xbf16>, vector<16x8xf32> -> vector<16x8xf32>
    %95 = arith.truncf %94 : vector<16x8xf32> to vector<16x8xbf16>
    %c2_70 = arith.constant 2 : index
    %c0_71 = arith.constant 0 : index
    %c0_72 = arith.constant 0 : index
    %96 = vector.load %arg7[%c2_70, %c0_71, %c0_72] : memref<4x32x8xbf16, #tpu.memory_space<vmem>>, vector<1x32x8xbf16>
    %97 = vector.shape_cast %96 : vector<1x32x8xbf16> to vector<32x8xbf16>
    %cst_73 = arith.constant dense<0.000000e+00> : vector<16x8xf32>
    %98 = tpu.matmul %5, %97, %cst_73 {dimension_numbers = #tpu.dot_dimension_numbers<[1], [0], [0], [1], [0, 0, 1, 1], [], []>} : vector<16x32xbf16>, vector<32x8xbf16>, vector<16x8xf32> -> vector<16x8xf32>
    %99 = arith.truncf %98 : vector<16x8xf32> to vector<16x8xbf16>
    %c2_74 = arith.constant 2 : index
    %c0_75 = arith.constant 0 : index
    %c0_76 = arith.constant 0 : index
    %100 = vector.load %arg9[%c2_74, %c0_75, %c0_76] : memref<4x16x8xbf16, #tpu.memory_space<vmem>>, vector<1x16x8xbf16>
    %101 = vector.shape_cast %100 : vector<1x16x8xbf16> to vector<16x8xbf16>
    %cst_77 = arith.constant dense<0.000000e+00> : vector<16x16xf32>
    %102 = tpu.matmul %101, %95, %cst_77 {dimension_numbers = #tpu.dot_dimension_numbers<[1], [1], [0], [0], [0, 0, 1, 0], [], []>} : vector<16x8xbf16>, vector<16x8xbf16>, vector<16x16xf32> -> vector<16x16xf32>
    %c2_78 = arith.constant 2 : index
    %c0_79 = arith.constant 0 : index
    %c0_80 = arith.constant 0 : index
    %103 = vector.load %arg10[%c2_78, %c0_79, %c0_80] : memref<4x16x1xf32, #tpu.memory_space<vmem>>, vector<1x16x1xf32>
    %104 = vector.shape_cast %103 : vector<1x16x1xf32> to vector<16x1xf32>
    %cst_81 = arith.constant dense<0xFF800000> : vector<16xf32>
    %105 = vector.multi_reduction <maximumf>, %102, %cst_81 [1] : vector<16x16xf32> to vector<16xf32>
    %106 = vector.shape_cast %105 : vector<16xf32> to vector<16x1xf32>
    %107 = arith.maximumf %104, %106 : vector<16x1xf32>
    %108 = arith.subf %104, %107 : vector<16x1xf32>
    %109 = math.exp %108 : vector<16x1xf32>
    %110 = vector.broadcast %107 : vector<16x1xf32> to vector<16x16xf32>
    %111 = arith.subf %102, %110 : vector<16x16xf32>
    %112 = math.exp %111 : vector<16x16xf32>
    %c2_82 = arith.constant 2 : index
    %c0_83 = arith.constant 0 : index
    %c0_84 = arith.constant 0 : index
    %113 = vector.load %arg11[%c2_82, %c0_83, %c0_84] : memref<4x16x1xf32, #tpu.memory_space<vmem>>, vector<1x16x1xf32>
    %114 = vector.shape_cast %113 : vector<1x16x1xf32> to vector<16x1xf32>
    %115 = arith.mulf %109, %114 : vector<16x1xf32>
    %cst_85 = arith.constant dense<0.000000e+00> : vector<16xf32>
    %116 = vector.multi_reduction <add>, %112, %cst_85 [1] : vector<16x16xf32> to vector<16xf32>
    %117 = vector.shape_cast %116 : vector<16xf32> to vector<16x1xf32>
    %118 = arith.addf %115, %117 : vector<16x1xf32>
    %c2_86 = arith.constant 2 : index
    %c0_87 = arith.constant 0 : index
    %c0_88 = arith.constant 0 : index
    %119 = vector.load %arg11[%c2_86, %c0_87, %c0_88] : memref<4x16x1xf32, #tpu.memory_space<vmem>>, vector<1x16x1xf32>
    %120 = vector.shape_cast %119 : vector<1x16x1xf32> to vector<16x1xf32>
    %121 = vector.shape_cast %118 : vector<16x1xf32> to vector<1x16x1xf32>
    tpu.vector_store %arg11[%c2_86, %c0_87, %c0_88], %121 {strides = array<i32>} : memref<4x16x1xf32, #tpu.memory_space<vmem>>, vector<1x16x1xf32>,
    %c2_89 = arith.constant 2 : index
    %c0_90 = arith.constant 0 : index
    %c0_91 = arith.constant 0 : index
    %122 = vector.load %arg12[%c2_89, %c0_90, %c0_91] : memref<4x16x8xf32, #tpu.memory_space<vmem>>, vector<1x16x8xf32>
    %123 = vector.shape_cast %122 : vector<1x16x8xf32> to vector<16x8xf32>
    %124 = vector.broadcast %109 : vector<16x1xf32> to vector<16x8xf32>
    %125 = arith.mulf %124, %123 : vector<16x8xf32>
    %126 = arith.truncf %112 : vector<16x16xf32> to vector<16x16xbf16>
    %cst_92 = arith.constant dense<0.000000e+00> : vector<16x8xf32>
    %127 = tpu.matmul %126, %99, %cst_92 {dimension_numbers = #tpu.dot_dimension_numbers<[1], [0], [0], [1], [0, 0, 1, 1], [], []>} : vector<16x16xbf16>, vector<16x8xbf16>, vector<16x8xf32> -> vector<16x8xf32>
    %128 = arith.addf %125, %127 : vector<16x8xf32>
    %c2_93 = arith.constant 2 : index
    %c0_94 = arith.constant 0 : index
    %c0_95 = arith.constant 0 : index
    %129 = vector.load %arg12[%c2_93, %c0_94, %c0_95] : memref<4x16x8xf32, #tpu.memory_space<vmem>>, vector<1x16x8xf32>
    %130 = vector.shape_cast %129 : vector<1x16x8xf32> to vector<16x8xf32>
    %131 = vector.shape_cast %128 : vector<16x8xf32> to vector<1x16x8xf32>
    tpu.vector_store %arg12[%c2_93, %c0_94, %c0_95], %131 {strides = array<i32>} : memref<4x16x8xf32, #tpu.memory_space<vmem>>, vector<1x16x8xf32>,
    %c2_96 = arith.constant 2 : index
    %c0_97 = arith.constant 0 : index
    %c0_98 = arith.constant 0 : index
    %132 = vector.load %arg10[%c2_96, %c0_97, %c0_98] : memref<4x16x1xf32, #tpu.memory_space<vmem>>, vector<1x16x1xf32>
    %133 = vector.shape_cast %132 : vector<1x16x1xf32> to vector<16x1xf32>
    %134 = vector.shape_cast %107 : vector<16x1xf32> to vector<1x16x1xf32>
    tpu.vector_store %arg10[%c2_96, %c0_97, %c0_98], %134 {strides = array<i32>} : memref<4x16x1xf32, #tpu.memory_space<vmem>>, vector<1x16x1xf32>,
    %c3 = arith.constant 3 : index
    %c0_99 = arith.constant 0 : index
    %c0_100 = arith.constant 0 : index
    %135 = vector.load %arg6[%c3, %c0_99, %c0_100] : memref<4x32x8xbf16, #tpu.memory_space<vmem>>, vector<1x32x8xbf16>
    %136 = vector.shape_cast %135 : vector<1x32x8xbf16> to vector<32x8xbf16>
    %cst_101 = arith.constant dense<0.000000e+00> : vector<16x8xf32>
    %137 = tpu.matmul %5, %136, %cst_101 {dimension_numbers = #tpu.dot_dimension_numbers<[1], [0], [0], [1], [0, 0, 1, 1], [], []>} : vector<16x32xbf16>, vector<32x8xbf16>, vector<16x8xf32> -> vector<16x8xf32>
    %138 = arith.truncf %137 : vector<16x8xf32> to vector<16x8xbf16>
    %c3_102 = arith.constant 3 : index
    %c0_103 = arith.constant 0 : index
    %c0_104 = arith.constant 0 : index
    %139 = vector.load %arg7[%c3_102, %c0_103, %c0_104] : memref<4x32x8xbf16, #tpu.memory_space<vmem>>, vector<1x32x8xbf16>
    %140 = vector.shape_cast %139 : vector<1x32x8xbf16> to vector<32x8xbf16>
    %cst_105 = arith.constant dense<0.000000e+00> : vector<16x8xf32>
    %141 = tpu.matmul %5, %140, %cst_105 {dimension_numbers = #tpu.dot_dimension_numbers<[1], [0], [0], [1], [0, 0, 1, 1], [], []>} : vector<16x32xbf16>, vector<32x8xbf16>, vector<16x8xf32> -> vector<16x8xf32>
    %142 = arith.truncf %141 : vector<16x8xf32> to vector<16x8xbf16>
    %c3_106 = arith.constant 3 : index
    %c0_107 = arith.constant 0 : index
    %c0_108 = arith.constant 0 : index
    %143 = vector.load %arg9[%c3_106, %c0_107, %c0_108] : memref<4x16x8xbf16, #tpu.memory_space<vmem>>, vector<1x16x8xbf16>
    %144 = vector.shape_cast %143 : vector<1x16x8xbf16> to vector<16x8xbf16>
    %cst_109 = arith.constant dense<0.000000e+00> : vector<16x16xf32>
    %145 = tpu.matmul %144, %138, %cst_109 {dimension_numbers = #tpu.dot_dimension_numbers<[1], [1], [0], [0], [0, 0, 1, 0], [], []>} : vector<16x8xbf16>, vector<16x8xbf16>, vector<16x16xf32> -> vector<16x16xf32>
    %c3_110 = arith.constant 3 : index
    %c0_111 = arith.constant 0 : index
    %c0_112 = arith.constant 0 : index
    %146 = vector.load %arg10[%c3_110, %c0_111, %c0_112] : memref<4x16x1xf32, #tpu.memory_space<vmem>>, vector<1x16x1xf32>
    %147 = vector.shape_cast %146 : vector<1x16x1xf32> to vector<16x1xf32>
    %cst_113 = arith.constant dense<0xFF800000> : vector<16xf32>
    %148 = vector.multi_reduction <maximumf>, %145, %cst_113 [1] : vector<16x16xf32> to vector<16xf32>
    %149 = vector.shape_cast %148 : vector<16xf32> to vector<16x1xf32>
    %150 = arith.maximumf %147, %149 : vector<16x1xf32>
    %151 = arith.subf %147, %150 : vector<16x1xf32>
    %152 = math.exp %151 : vector<16x1xf32>
    %153 = vector.broadcast %150 : vector<16x1xf32> to vector<16x16xf32>
    %154 = arith.subf %145, %153 : vector<16x16xf32>
    %155 = math.exp %154 : vector<16x16xf32>
    %c3_114 = arith.constant 3 : index
    %c0_115 = arith.constant 0 : index
    %c0_116 = arith.constant 0 : index
    %156 = vector.load %arg11[%c3_114, %c0_115, %c0_116] : memref<4x16x1xf32, #tpu.memory_space<vmem>>, vector<1x16x1xf32>
    %157 = vector.shape_cast %156 : vector<1x16x1xf32> to vector<16x1xf32>
    %158 = arith.mulf %152, %157 : vector<16x1xf32>
    %cst_117 = arith.constant dense<0.000000e+00> : vector<16xf32>
    %159 = vector.multi_reduction <add>, %155, %cst_117 [1] : vector<16x16xf32> to vector<16xf32>
    %160 = vector.shape_cast %159 : vector<16xf32> to vector<16x1xf32>
    %161 = arith.addf %158, %160 : vector<16x1xf32>
    %c3_118 = arith.constant 3 : index
    %c0_119 = arith.constant 0 : index
    %c0_120 = arith.constant 0 : index
    %162 = vector.load %arg11[%c3_118, %c0_119, %c0_120] : memref<4x16x1xf32, #tpu.memory_space<vmem>>, vector<1x16x1xf32>
    %163 = vector.shape_cast %162 : vector<1x16x1xf32> to vector<16x1xf32>
    %164 = vector.shape_cast %161 : vector<16x1xf32> to vector<1x16x1xf32>
    tpu.vector_store %arg11[%c3_118, %c0_119, %c0_120], %164 {strides = array<i32>} : memref<4x16x1xf32, #tpu.memory_space<vmem>>, vector<1x16x1xf32>,
    %c3_121 = arith.constant 3 : index
    %c0_122 = arith.constant 0 : index
    %c0_123 = arith.constant 0 : index
    %165 = vector.load %arg12[%c3_121, %c0_122, %c0_123] : memref<4x16x8xf32, #tpu.memory_space<vmem>>, vector<1x16x8xf32>
    %166 = vector.shape_cast %165 : vector<1x16x8xf32> to vector<16x8xf32>
    %167 = vector.broadcast %152 : vector<16x1xf32> to vector<16x8xf32>
    %168 = arith.mulf %167, %166 : vector<16x8xf32>
    %169 = arith.truncf %155 : vector<16x16xf32> to vector<16x16xbf16>
    %cst_124 = arith.constant dense<0.000000e+00> : vector<16x8xf32>
    %170 = tpu.matmul %169, %142, %cst_124 {dimension_numbers = #tpu.dot_dimension_numbers<[1], [0], [0], [1], [0, 0, 1, 1], [], []>} : vector<16x16xbf16>, vector<16x8xbf16>, vector<16x8xf32> -> vector<16x8xf32>
    %171 = arith.addf %168, %170 : vector<16x8xf32>
    %c3_125 = arith.constant 3 : index
    %c0_126 = arith.constant 0 : index
    %c0_127 = arith.constant 0 : index
    %172 = vector.load %arg12[%c3_125, %c0_126, %c0_127] : memref<4x16x8xf32, #tpu.memory_space<vmem>>, vector<1x16x8xf32>
    %173 = vector.shape_cast %172 : vector<1x16x8xf32> to vector<16x8xf32>
    %174 = vector.shape_cast %171 : vector<16x8xf32> to vector<1x16x8xf32>
    tpu.vector_store %arg12[%c3_125, %c0_126, %c0_127], %174 {strides = array<i32>} : memref<4x16x8xf32, #tpu.memory_space<vmem>>, vector<1x16x8xf32>,
    %c3_128 = arith.constant 3 : index
    %c0_129 = arith.constant 0 : index
    %c0_130 = arith.constant 0 : index
    %175 = vector.load %arg10[%c3_128, %c0_129, %c0_130] : memref<4x16x1xf32, #tpu.memory_space<vmem>>, vector<1x16x1xf32>
    %176 = vector.shape_cast %175 : vector<1x16x1xf32> to vector<16x1xf32>
    %177 = vector.shape_cast %150 : vector<16x1xf32> to vector<1x16x1xf32>
    tpu.vector_store %arg10[%c3_128, %c0_129, %c0_130], %177 {strides = array<i32>} : memref<4x16x1xf32, #tpu.memory_space<vmem>>, vector<1x16x1xf32>,
    %c0_i32_131 = arith.constant 0 : i32
    %178 = arith.cmpi eq, %arg2, %c0_i32_131 : i32
    %179 = arith.extui %178 : i1 to i32
    %c0_i32_132 = arith.constant 0 : i32
    %180 = arith.cmpi ne, %179, %c0_i32_132 : i32
    scf.if %180 {
      %c0_133 = arith.constant 0 : index
      %c0_134 = arith.constant 0 : index
      %c0_135 = arith.constant 0 : index
      %181 = vector.load %arg12[%c0_133, %c0_134, %c0_135] : memref<4x16x8xf32, #tpu.memory_space<vmem>>, vector<1x16x8xf32>
      %182 = vector.shape_cast %181 : vector<1x16x8xf32> to vector<16x8xf32>
      %c0_136 = arith.constant 0 : index
      %c0_137 = arith.constant 0 : index
      %c0_138 = arith.constant 0 : index
      %183 = vector.load %arg11[%c0_136, %c0_137, %c0_138] : memref<4x16x1xf32, #tpu.memory_space<vmem>>, vector<1x16x1xf32>
      %184 = vector.shape_cast %183 : vector<1x16x1xf32> to vector<16x1xf32>
      %185 = vector.broadcast %184 : vector<16x1xf32> to vector<16x8xf32>
      %186 = arith.divf %182, %185 : vector<16x8xf32>
      %c1_139 = arith.constant 1 : index
      %c0_140 = arith.constant 0 : index
      %c0_141 = arith.constant 0 : index
      %187 = vector.load %arg12[%c1_139, %c0_140, %c0_141] : memref<4x16x8xf32, #tpu.memory_space<vmem>>, vector<1x16x8xf32>
      %188 = vector.shape_cast %187 : vector<1x16x8xf32> to vector<16x8xf32>
      %c1_142 = arith.constant 1 : index
      %c0_143 = arith.constant 0 : index
      %c0_144 = arith.constant 0 : index
      %189 = vector.load %arg11[%c1_142, %c0_143, %c0_144] : memref<4x16x1xf32, #tpu.memory_space<vmem>>, vector<1x16x1xf32>
      %190 = vector.shape_cast %189 : vector<1x16x1xf32> to vector<16x1xf32>
      %191 = vector.broadcast %190 : vector<16x1xf32> to vector<16x8xf32>
      %192 = arith.divf %188, %191 : vector<16x8xf32>
      %c2_145 = arith.constant 2 : index
      %c0_146 = arith.constant 0 : index
      %c0_147 = arith.constant 0 : index
      %193 = vector.load %arg12[%c2_145, %c0_146, %c0_147] : memref<4x16x8xf32, #tpu.memory_space<vmem>>, vector<1x16x8xf32>
      %194 = vector.shape_cast %193 : vector<1x16x8xf32> to vector<16x8xf32>
      %c2_148 = arith.constant 2 : index
      %c0_149 = arith.constant 0 : index
      %c0_150 = arith.constant 0 : index
      %195 = vector.load %arg11[%c2_148, %c0_149, %c0_150] : memref<4x16x1xf32, #tpu.memory_space<vmem>>, vector<1x16x1xf32>
      %196 = vector.shape_cast %195 : vector<1x16x1xf32> to vector<16x1xf32>
      %197 = vector.broadcast %196 : vector<16x1xf32> to vector<16x8xf32>
      %198 = arith.divf %194, %197 : vector<16x8xf32>
      %c3_151 = arith.constant 3 : index
      %c0_152 = arith.constant 0 : index
      %c0_153 = arith.constant 0 : index
      %199 = vector.load %arg12[%c3_151, %c0_152, %c0_153] : memref<4x16x8xf32, #tpu.memory_space<vmem>>, vector<1x16x8xf32>
      %200 = vector.shape_cast %199 : vector<1x16x8xf32> to vector<16x8xf32>
      %c3_154 = arith.constant 3 : index
      %c0_155 = arith.constant 0 : index
      %c0_156 = arith.constant 0 : index
      %201 = vector.load %arg11[%c3_154, %c0_155, %c0_156] : memref<4x16x1xf32, #tpu.memory_space<vmem>>, vector<1x16x1xf32>
      %202 = vector.shape_cast %201 : vector<1x16x1xf32> to vector<16x1xf32>
      %203 = vector.broadcast %202 : vector<16x1xf32> to vector<16x8xf32>
      %204 = arith.divf %200, %203 : vector<16x8xf32>
      %205 = tpu.concatenate %186, %192, %198, %204 in 1 : vector<16x8xf32>, vector<16x8xf32>, vector<16x8xf32>, vector<16x8xf32> -> vector<16x32xf32>
      %c0_157 = arith.constant 0 : index
      %c0_158 = arith.constant 0 : index
      %c0_159 = arith.constant 0 : index
      %206 = vector.load %arg8[%c0_157, %c0_158, %c0_159] : memref<1x16x32xf32, #tpu.memory_space<vmem>>, vector<1x16x32xf32>
      %207 = vector.shape_cast %206 : vector<1x16x32xf32> to vector<16x32xf32>
      %208 = vector.shape_cast %205 : vector<16x32xf32> to vector<1x16x32xf32>
      tpu.vector_store %arg8[%c0_157, %c0_158, %c0_159], %208 {strides = array<i32>} : memref<1x16x32xf32, #tpu.memory_space<vmem>>, vector<1x16x32xf32>,
    } else {
    }
    return
  }
  func.func @transform_0(%arg0: i32, %arg1: i32, %arg2: i32) -> (i32, i32, i32) {
    %c0_i32 = arith.constant 0 : i32
    %c0_i32_0 = arith.constant 0 : i32
    return %arg0, %arg1, %c0_i32 : i32, i32, i32
  }
  func.func @transform_1(%arg0: i32, %arg1: i32, %arg2: i32) -> (i32, i32, i32) {
    %c0_i32 = arith.constant 0 : i32
    %c0_i32_0 = arith.constant 0 : i32
    return %arg0, %arg2, %c0_i32 : i32, i32, i32
  }
  func.func @transform_2(%arg0: i32, %arg1: i32, %arg2: i32) -> (i32, i32, i32) {
    %c0_i32 = arith.constant 0 : i32
    %c0_i32_0 = arith.constant 0 : i32
    %c0_i32_1 = arith.constant 0 : i32
    %c0_i32_2 = arith.constant 0 : i32
    return %c0_i32, %c0_i32_0, %c0_i32_1 : i32, i32, i32
  }
  func.func @transform_3(%arg0: i32, %arg1: i32, %arg2: i32) -> (i32, i32, i32) {
    %c0_i32 = arith.constant 0 : i32
    %c0_i32_0 = arith.constant 0 : i32
    %c0_i32_1 = arith.constant 0 : i32
    %c0_i32_2 = arith.constant 0 : i32
    return %c0_i32, %c0_i32_0, %c0_i32_1 : i32, i32, i32
  }
  func.func @transform_4(%arg0: i32, %arg1: i32, %arg2: i32) -> (i32, i32, i32) {
    %c0_i32 = arith.constant 0 : i32
    %c0_i32_0 = arith.constant 0 : i32
    %c0_i32_1 = arith.constant 0 : i32
    %c0_i32_2 = arith.constant 0 : i32
    return %c0_i32, %c0_i32_0, %c0_i32_1 : i32, i32, i32
  }
  func.func @transform_5(%arg0: i32, %arg1: i32, %arg2: i32) -> (i32, i32, i32) {
    %c0_i32 = arith.constant 0 : i32
    %c0_i32_0 = arith.constant 0 : i32
    return %arg0, %arg1, %c0_i32 : i32, i32, i32
  }
}

</mosaic_0001>

<llo_original>
// kernel: tpu_custom_call.1
$region0: #{tpu_custom_call.1}
  #allocation0 [shape = 'u32[]', space=smem, size = 0x4, offset = 0x4, fixed_abs, tag = 'smem constant byte address 0x4 - core index']
  #allocation1 [shape = 'u32[144,128]{1,0:T(1,128)}', space=vmem, size = 0x12000, scoped, tag = 'internal scratch']
  #allocation2 [shape = 'bf16[4,16,8]{2,1,0:T(8,128)(2,1)}', space=vmem, size = 0x4000, scoped, tag = 'scratch operand']
  #allocation3 [shape = 'f32[4,16,1]{2,1,0:T(8,128)}', space=vmem, size = 0x8000, scoped, tag = 'scratch operand']
  #allocation4 [shape = 'f32[4,16,1]{2,1,0:T(8,128)}', space=vmem, size = 0x8000, scoped, tag = 'scratch operand']
  #allocation5 [shape = 'f32[4,16,8]{2,1,0:T(8,128)}', space=vmem, size = 0x8000, scoped, tag = 'scratch operand']
  %s0 = inlined_call_operand.vmem [shape: f32[2,16,32], index: 0, kind: input, shape index: {}]
  %s1 = inlined_call_operand.vmem [shape: f32[2,16,32], index: 1, kind: input, shape index: {}]
  %s2 = inlined_call_operand.vmem [shape: bf16[4,32,8], index: 2, kind: input, shape index: {}]
  %s3 = inlined_call_operand.vmem [shape: bf16[4,32,8], index: 3, kind: input, shape index: {}]
  %s4 = inlined_call_operand.vmem [shape: bf16[4,32,8], index: 4, kind: input, shape index: {}]
  %s5 = inlined_call_operand.hbm [shape: f32[2,16,32], index: 5, kind: output, shape index: {}]
  %s6 = sld [smem:[#allocation0]]
  $region61: #{tpu_custom_call.1} parent=0
    _
  %s8 = ssub.s32 1, %s6
  %s9 = scalar_select 0, %s8, %s6
  $region1: #{tpu_custom_call.1} parent=0
    #allocation6 [shape = 'u8[16384]{0}', space=vmem, size = 0x4000, scoped, tag = 'output window, operand 0']
    #allocation7 [shape = 's32[2]{0}', space=sflag, size = 0x8, scoped, tag = 'scoped memory for tpu_custom_call.1']
    %10 = vsyncpa [#allocation7], 0
    %s11 = scalar_lea.sflag [#allocation7], 1
    %12 = vsyncpa %s11, 0
    loop: start=0, step=1, limit=4
    $region2: #{tpu_custom_call.1} parent=1 // loop_pre_header
      _
    $region3: #{tpu_custom_call.1} parent=1 // loop_header
      %s14 = sphi 0, %s18
      %p15 = scmp.ge.s32.totalorder %s14, 4
      %s21 = sphi 0, %s40
      %s22 = sphi 0, %s36
      %s23 = sphi 0, %s32
      %s24 = sphi 0, %s21
      %s25 = sphi 0, %s22
      %s26 = sphi 0, %s23
      %s27 = sphi 0, %s24
      %s28 = sphi 0, %s25
      %s29 = sphi 0, %s26
      %s45 = sphi 0, %s47
      %s48 = sphi 0, %s45
      %s49 = sphi 0, %s48
      %s65 = sphi 0, %s49
      %s73 = sphi 0, %s75
      %s76 = sphi 0, %s73
      %s77 = sphi 0, %s76
      %s93 = sphi 0, %s77
      %s97 = sphi 0, %s97
      %s99 = sphi 0, %s97
      %s100 = sphi 0, %s99
      %s114 = sphi 0, %s100
      %s118 = sphi 0, %s118
      %s120 = sphi 0, %s118
      %s121 = sphi 0, %s120
      %s135 = sphi 0, %s121
      %s139 = sphi 0, %s139
      %s141 = sphi 0, %s139
      %s142 = sphi 0, %s141
      %s156 = sphi 0, %s142
      %s164 = sphi 0, %s166
      %s167 = sphi 0, %s164
      %s168 = sphi 0, %s167
      %s184 = sphi 0, %s168
    $region4: #{tpu_custom_call.1} parent=1 // loop_header_branch
      %17 = sbr.rel (%p15) target = $region8
    $region5: #{tpu_custom_call.1} parent=1 // loop_body
      %s19 = ssub.s32 %s14, 1
      %s20 = ssub.s32 %s14, 2
      %s30 = sadd.s32 1, %s23
      %p31 = scmp.ge.s32.totalorder %s30, 1
      %s32 = scalar_select %p31, 0, %s30
      %s33 = sadd.s32 1, %s22
      %s34 = scalar_select %p31, %s33, %s22
      %p35 = scmp.ge.s32.totalorder %s34, 1
      %s36 = scalar_select %p35, 0, %s34
      %s37 = sadd.s32 1, %s21
      %s38 = scalar_select %p35, %s37, %s21
      %p39 = scmp.ge.s32.totalorder %s38, 2
      %s40 = scalar_select %p39, 0, %s38
      %s41 = ssub.s32 %s21, %s40
      %s42 = ssub.s32 %s22, %s36
      %s43 = sor.u32 %s41, %s42
      %p44 = scmp.eq.s32.totalorder %s43, 0
      %s46 = sadd.s32 %s45, 1
      %s47 = scalar_select %p44, %s45, %s46
      %p50 = pneg %p44
      %p51 = scmp.eq.s32.totalorder %s14, 1
      %p52 = por %p50, %p51
      %p53 = scmp.ne.s32.totalorder %s45, %s48
      %p54 = scmp.eq.s32.totalorder %s14, 0
      %p55 = por %p53, %p54
      %p56 = scmp.ne.s32.totalorder %s45, %s48
      %p57 = scmp.eq.s32.totalorder %s19, 1
      %p58 = por %p56, %p57
      %p59 = scmp.ne.s32.totalorder %s48, %s49
      %p60 = scmp.eq.s32.totalorder %s19, 0
      %p61 = por %p59, %p60
      %p62 = scmp.ne.s32.totalorder %s48, %s49
      %p63 = scmp.eq.s32.totalorder %s20, 1
      %p64 = por %p62, %p63
      %p66 = scmp.ne.s32.totalorder %s49, %s65
      %p67 = scmp.eq.s32.totalorder %s20, 0
      %p68 = por %p66, %p67
      %s69 = ssub.s32 %s21, %s40
      %s70 = ssub.s32 %s23, %s32
      %s71 = sor.u32 %s69, %s70
      %p72 = scmp.eq.s32.totalorder %s71, 0
      %s74 = sadd.s32 %s73, 1
      %s75 = scalar_select %p72, %s73, %s74
      %p78 = pneg %p72
      %p79 = scmp.eq.s32.totalorder %s14, 1
      %p80 = por %p78, %p79
      %p81 = scmp.ne.s32.totalorder %s73, %s76
      %p82 = scmp.eq.s32.totalorder %s14, 0
      %p83 = por %p81, %p82
      %p84 = scmp.ne.s32.totalorder %s73, %s76
      %p85 = scmp.eq.s32.totalorder %s19, 1
      %p86 = por %p84, %p85
      %p87 = scmp.ne.s32.totalorder %s76, %s77
      %p88 = scmp.eq.s32.totalorder %s19, 0
      %p89 = por %p87, %p88
      %p90 = scmp.ne.s32.totalorder %s76, %s77
      %p91 = scmp.eq.s32.totalorder %s20, 1
      %p92 = por %p90, %p91
      %p94 = scmp.ne.s32.totalorder %s77, %s93
      %p95 = scmp.eq.s32.totalorder %s20, 0
      %p96 = por %p94, %p95
      %s98 = sadd.s32 %s97, 1
      %p101 = scmp.eq.s32.totalorder %s14, 1
      %p102 = scmp.ne.s32.totalorder %s97, %s99
      %p103 = scmp.eq.s32.totalorder %s14, 0
      %p104 = por %p102, %p103
      %p105 = scmp.ne.s32.totalorder %s97, %s99
      %p106 = scmp.eq.s32.totalorder %s19, 1
      %p107 = por %p105, %p106
      %p108 = scmp.ne.s32.totalorder %s99, %s100
      %p109 = scmp.eq.s32.totalorder %s19, 0
      %p110 = por %p108, %p109
      %p111 = scmp.ne.s32.totalorder %s99, %s100
      %p112 = scmp.eq.s32.totalorder %s20, 1
      %p113 = por %p111, %p112
      %p115 = scmp.ne.s32.totalorder %s100, %s114
      %p116 = scmp.eq.s32.totalorder %s20, 0
      %p117 = por %p115, %p116
      %s119 = sadd.s32 %s118, 1
      %p122 = scmp.eq.s32.totalorder %s14, 1
      %p123 = scmp.ne.s32.totalorder %s118, %s120
      %p124 = scmp.eq.s32.totalorder %s14, 0
      %p125 = por %p123, %p124
      %p126 = scmp.ne.s32.totalorder %s118, %s120
      %p127 = scmp.eq.s32.totalorder %s19, 1
      %p128 = por %p126, %p127
      %p129 = scmp.ne.s32.totalorder %s120, %s121
      %p130 = scmp.eq.s32.totalorder %s19, 0
      %p131 = por %p129, %p130
      %p132 = scmp.ne.s32.totalorder %s120, %s121
      %p133 = scmp.eq.s32.totalorder %s20, 1
      %p134 = por %p132, %p133
      %p136 = scmp.ne.s32.totalorder %s121, %s135
      %p137 = scmp.eq.s32.totalorder %s20, 0
      %p138 = por %p136, %p137
      %s140 = sadd.s32 %s139, 1
      %p143 = scmp.eq.s32.totalorder %s14, 1
      %p144 = scmp.ne.s32.totalorder %s139, %s141
      %p145 = scmp.eq.s32.totalorder %s14, 0
      %p146 = por %p144, %p145
      %p147 = scmp.ne.s32.totalorder %s139, %s141
      %p148 = scmp.eq.s32.totalorder %s19, 1
      %p149 = por %p147, %p148
      %p150 = scmp.ne.s32.totalorder %s141, %s142
      %p151 = scmp.eq.s32.totalorder %s19, 0
      %p152 = por %p150, %p151
      %p153 = scmp.ne.s32.totalorder %s141, %s142
      %p154 = scmp.eq.s32.totalorder %s20, 1
      %p155 = por %p153, %p154
      %p157 = scmp.ne.s32.totalorder %s142, %s156
      %p158 = scmp.eq.s32.totalorder %s20, 0
      %p159 = por %p157, %p158
      %s160 = ssub.s32 %s21, %s40
      %s161 = ssub.s32 %s22, %s36
      %s162 = sor.u32 %s160, %s161
      %p163 = scmp.eq.s32.totalorder %s162, 0
      %s165 = sadd.s32 %s164, 1
      %s166 = scalar_select %p163, %s164, %s165
      %p169 = pneg %p163
      %p170 = scmp.eq.s32.totalorder %s14, 1
      %p171 = por %p169, %p170
      %p172 = scmp.ne.s32.totalorder %s164, %s167
      %p173 = scmp.eq.s32.totalorder %s14, 0
      %p174 = por %p172, %p173
      %p175 = scmp.ne.s32.totalorder %s164, %s167
      %p176 = scmp.eq.s32.totalorder %s19, 1
      %p177 = por %p175, %p176
      %p178 = scmp.ne.s32.totalorder %s167, %s168
      %p179 = scmp.eq.s32.totalorder %s19, 0
      %p180 = por %p178, %p179
      %p181 = scmp.ne.s32.totalorder %s167, %s168
      %p182 = scmp.eq.s32.totalorder %s20, 1
      %p183 = por %p181, %p182
      %p185 = scmp.ne.s32.totalorder %s168, %s184
      %p186 = scmp.eq.s32.totalorder %s20, 0
      %p187 = por %p185, %p186
      %p188 = scmp.le.s32.totalorder 1, %s14
      %p189 = scmp.lt.s32.totalorder %s14, 3
      %p190 = pnand %p188, %p189
      %p191 = pneg %p190
      // Predicated region
      $region9: #{tpu_custom_call.1} parent=5 // pred_check
        _
      $region10: #{tpu_custom_call.1} parent=5 // pred_check_branch
        %193 = sbr.rel (%p190) target = $region12
      $region11: #{tpu_custom_call.1} parent=5 // pred_region
        %s194 = ssub.s32 %s14, 1
        // Predicated region
        $region13: #{tpu_custom_call.1} parent=11 // pred_check
          %p195 = pneg %p110
        $region14: #{tpu_custom_call.1} parent=11 // pred_check_branch
          %197 = sbr.rel (%p195) target = $region16
        $region15: #{tpu_custom_call.1} parent=11 // pred_region
          _
        $region16: #{tpu_custom_call.1} parent=11 // pred_fallthru
          _
        // Predicated region
        $region17: #{tpu_custom_call.1} parent=11 // pred_check
          %p198 = pneg %p131
        $region18: #{tpu_custom_call.1} parent=11 // pred_check_branch
          %200 = sbr.rel (%p198) target = $region20
        $region19: #{tpu_custom_call.1} parent=11 // pred_region
          _
        $region20: #{tpu_custom_call.1} parent=11 // pred_fallthru
          _
        // Predicated region
        $region21: #{tpu_custom_call.1} parent=11 // pred_check
          %p201 = pneg %p152
        $region22: #{tpu_custom_call.1} parent=11 // pred_check_branch
          %203 = sbr.rel (%p201) target = $region24
        $region23: #{tpu_custom_call.1} parent=11 // pred_region
          _
        $region24: #{tpu_custom_call.1} parent=11 // pred_fallthru
          _
      $region12: #{tpu_custom_call.1} parent=5 // pred_fallthru
        _
      %p204 = scmp.lt.s32.totalorder %s14, 2
      // Predicated region
      $region25: #{tpu_custom_call.1} parent=5 // pred_check
        %p205 = pneg %p204
      $region26: #{tpu_custom_call.1} parent=5 // pred_check_branch
        %207 = sbr.rel (%p205) target = $region28
      $region27: #{tpu_custom_call.1} parent=5 // pred_region
        // Predicated region
        $region29: #{tpu_custom_call.1} parent=27 // pred_check
          %p208 = pneg %p55
        $region30: #{tpu_custom_call.1} parent=27 // pred_check_branch
          %210 = sbr.rel (%p208) target = $region32
        $region31: #{tpu_custom_call.1} parent=27 // pred_region
          %s211 = smul.u32 2, %s22
          %p212 = scmp.lt.s32.totalorder %s21, 1
          %s213 = scalar_select %p212, %s21, 1
          %p214 = scmp.lt.s32.totalorder %s211, 1
          %s215 = scalar_select %p214, %s211, 1
          %s216 = smul.addr %s213, 2
          %s217 = sadd.s32 %s215, %s216
          %s218 = smul.addr %s217, 8
          %s219 = scalar_lea.vmem %s0, %s218
          %s220 = smul.u32 2, %s22
        $region32: #{tpu_custom_call.1} parent=27 // pred_fallthru
          _
        // Predicated region
        $region33: #{tpu_custom_call.1} parent=27 // pred_check
          %p221 = pneg %p83
        $region34: #{tpu_custom_call.1} parent=27 // pred_check_branch
          %223 = sbr.rel (%p221) target = $region36
        $region35: #{tpu_custom_call.1} parent=27 // pred_region
          %s224 = smul.u32 2, %s23
          %p225 = scmp.lt.s32.totalorder %s21, 1
          %s226 = scalar_select %p225, %s21, 1
          %p227 = scmp.lt.s32.totalorder %s224, 1
          %s228 = scalar_select %p227, %s224, 1
          %s229 = smul.addr %s226, 2
          %s230 = sadd.s32 %s228, %s229
          %s231 = smul.addr %s230, 8
          %s232 = scalar_lea.vmem %s1, %s231
          %s233 = smul.u32 2, %s23
        $region36: #{tpu_custom_call.1} parent=27 // pred_fallthru
          _
      $region28: #{tpu_custom_call.1} parent=5 // pred_fallthru
        _
      %p234 = scmp.le.s32.totalorder 1, %s14
      %p235 = scmp.lt.s32.totalorder %s14, 3
      %p236 = pnand %p234, %p235
      %p237 = pneg %p236
      // Predicated region
      $region37: #{tpu_custom_call.1} parent=5 // pred_check
        _
      $region38: #{tpu_custom_call.1} parent=5 // pred_check_branch
        %239 = sbr.rel (%p236) target = $region40
      $region39: #{tpu_custom_call.1} parent=5 // pred_region
        %s240 = ssub.s32 %s14, 1
        %s241 = smul.u32 2, %s25
        %p242 = scmp.lt.s32.totalorder %s24, 1
        %s243 = scalar_select %p242, %s24, 1
        %p244 = scmp.lt.s32.totalorder %s241, 1
        %s245 = scalar_select %p244, %s241, 1
        %s246 = smul.addr %s243, 2
        %s247 = sadd.s32 %s245, %s246
        %s248 = smul.addr %s247, 8
        %s249 = scalar_lea.vmem %s0, %s248
        %p250 = pneg %p61
        %p251 = pneg %p58
        %s252 = smul.u32 2, %s26
        %p253 = scmp.lt.s32.totalorder %s24, 1
        %s254 = scalar_select %p253, %s24, 1
        %p255 = scmp.lt.s32.totalorder %s252, 1
        %s256 = scalar_select %p255, %s252, 1
        %s257 = smul.addr %s254, 2
        %s258 = sadd.s32 %s256, %s257
        %s259 = smul.addr %s258, 8
        %s260 = scalar_lea.vmem %s1, %s259
        %p261 = pneg %p89
        %p262 = pneg %p86
        %p263 = pneg %p110
        %p264 = pneg %p107
        %p265 = pneg %p131
        %p266 = pneg %p128
        %p267 = pneg %p152
        %p268 = pneg %p149
        %p269 = pneg %p180
        %p270 = pneg %p177
        %s271 = sand.u32 %s167, 1
        %s272 = scalar_lea.sflag [#allocation7], %s271
        %s273 = sand.u32 %s167, 1
        %s274 = smul.addr %s273, 16
        %s275 = scalar_lea.vmem [#allocation6], %s274
        %s276 = smul.u32 2, %s25
        %p277 = scmp.lt.s32.totalorder %s24, 1
        %s278 = scalar_select %p277, %s24, 1
        %p279 = scmp.lt.s32.totalorder %s276, 1
        %s280 = scalar_select %p279, %s276, 1
        %s281 = smul.addr %s278, 2
        %s282 = sadd.s32 %s280, %s281
        %s283 = smul.addr %s282, 8
        %s284 = scalar_lea.vmem %s0, %s283
        %s285 = smul.u32 2, %s25
        %s286 = smul.u32 2, %s26
        %p287 = scmp.lt.s32.totalorder %s24, 1
        %s288 = scalar_select %p287, %s24, 1
        %p289 = scmp.lt.s32.totalorder %s286, 1
        %s290 = scalar_select %p289, %s286, 1
        %s291 = smul.addr %s288, 2
        %s292 = sadd.s32 %s290, %s291
        %s293 = smul.addr %s292, 8
        %s294 = scalar_lea.vmem %s1, %s293
        %s295 = smul.u32 2, %s26
        %s296 = smul.u32 2, %s25
        %p298 = scmp.eq.s32.totalorder %s26, 0
        // Predicated region
        $region41: #{tpu_custom_call.1} parent=39 // pred_check
          %p299 = pneg %p298
        $region42: #{tpu_custom_call.1} parent=39 // pred_check_branch
          %301 = sbr.rel (%p299) target = $region44
        $region43: #{tpu_custom_call.1} parent=39 // pred_region
          %v302 = vld [vmem:[%s284] sm:$0xff]
          %v303 = vld [vmem:[%s284 + $0x8] sm:$0xff]
          %v304 = vpack.c.bf16 %v303, %v302
          %v305 = vld [vmem:[%s2] sm:$0xf]
          %v306 = vld [vmem:[%s2 + $0x4] sm:$0xf]
          %v307 = vld [vmem:[%s2 + $0x8] sm:$0xf]
          %v308 = vld [vmem:[%s2 + $0xc] sm:$0xf]
          %v313 = vunpack.c.l.b16 %v305
          %v314 = vunpack.c.l.b16 %v306
          %v315 = vunpack.c.l.b16 %v307
          %v316 = vunpack.c.l.b16 %v308
          %v317 = vpack.c.b16 %v314, %v313
          %v318 = vpack.c.b16 %v316, %v315
          %vm321 = vcmask 261120
          %v323 = vsel %vm321, %v304, 0
          %325 = vmatprep.subr.bf16.mxu0 0
          %326 = vmatpush1.bf16.msra.mxu0 0
          %327 = vmatprep.subr.bf16.mxu0 0
          %328 = vmatpush1.bf16.msra.mxu0 0
          %329 = vmatprep.subr.bf16.mxu0 0
          %330 = vmatpush1.bf16.msra.mxu0 0
          %331 = vmatprep.subr.bf16.mxu0 0
          %332 = vmatpush1.bf16.msra.mxu0 0
          %333 = vmatprep.subr.bf16.mxu0 0
          %334 = vmatpush1.bf16.msra.mxu0 0
          %335 = vmatprep.subr.bf16.mxu0 0
          %336 = vmatpush1.bf16.msra.mxu0 0
          %337 = vmatprep.subr.bf16.mxu0 0
          %338 = vmatpush1.bf16.msra.mxu0 %v318
          %339 = vmatprep.subr.bf16.mxu0 0
          %340 = vmatpush1.bf16.msra.mxu0 %v317
          %341 = vmatprep.subr.bf16.mxu0 0
          %342 = vmatpush2.bf16.msra.mxu0 0
          %343 = vmatprep.subr.bf16.mxu0 0
          %344 = vmatpush2.bf16.msra.mxu0 0
          %345 = vmatprep.subr.bf16.mxu0 0
          %346 = vmatpush2.bf16.msra.mxu0 0
          %347 = vmatprep.subr.bf16.mxu0 0
          %348 = vmatpush2.bf16.msra.mxu0 0
          %349 = vmatprep.subr.bf16.mxu0 0
          %350 = vmatpush2.bf16.msra.mxu0 0
          %351 = vmatprep.subr.bf16.mxu0 0
          %352 = vmatpush2.bf16.msra.mxu0 0
          %353 = vmatprep.subr.bf16.mxu0 0
          %354 = vmatpush2.bf16.msra.mxu0 0
          %355 = vmatprep.subr.bf16.mxu0 0
          %356 = vmatpush2.bf16.msra.mxu0 0
          %357 = vmatprep.mubr.bf16.mxu0 0
          %358 = vmatmul.mubr.bf16.gmra.mxu0 %v323
          %v359 = vpop.f32.mrf.mxu0
          %v360 = vadd.f32 0.0, %v359
          %v361 = vpop.f32.mrf.mxu0
          %v362 = vpop.f32.mrf.mxu0
          %v363 = vadd.f32 0.0, %v362
          %v364 = vpop.f32.mrf.mxu0
          %365 = vdwg.mxu0
          %v366 = vpack.c.bf16 %v363, %v360
          %v368 = vunpack.c.l.b16 %v366
          %v369 = vunpack.c.h.b16 %v366
          %v370 = vpack.c.b16 %v368, %v368
          %v371 = vpack.c.b16 %v369, %v369
          %vm374 = vcmask 60416
          %375 = vst.msk [vmem:[#allocation2] sm:$0xf] %vm374, %v370
          %376 = vst.msk [vmem:[#allocation2 + $0x4] sm:$0xf] %vm374, %v371
          %s377 = scalar_lea.vmem %s2, 16
          %v378 = vld [vmem:[%s377] sm:$0xf]
          %v379 = vld [vmem:[%s377 + $0x4] sm:$0xf]
          %v380 = vld [vmem:[%s377 + $0x8] sm:$0xf]
          %v381 = vld [vmem:[%s377 + $0xc] sm:$0xf]
          %v386 = vunpack.c.l.b16 %v378
          %v387 = vunpack.c.l.b16 %v379
          %v388 = vunpack.c.l.b16 %v380
          %v389 = vunpack.c.l.b16 %v381
          %v390 = vpack.c.b16 %v387, %v386
          %v391 = vpack.c.b16 %v389, %v388
          %394 = vmatprep.subr.bf16.mxu0 0
          %395 = vmatpush1.bf16.msra.mxu0 0
          %396 = vmatprep.subr.bf16.mxu0 0
          %397 = vmatpush1.bf16.msra.mxu0 0
          %398 = vmatprep.subr.bf16.mxu0 0
          %399 = vmatpush1.bf16.msra.mxu0 0
          %400 = vmatprep.subr.bf16.mxu0 0
          %401 = vmatpush1.bf16.msra.mxu0 0
          %402 = vmatprep.subr.bf16.mxu0 0
          %403 = vmatpush1.bf16.msra.mxu0 0
          %404 = vmatprep.subr.bf16.mxu0 0
          %405 = vmatpush1.bf16.msra.mxu0 0
          %406 = vmatprep.subr.bf16.mxu0 0
          %407 = vmatpush1.bf16.msra.mxu0 %v391
          %408 = vmatprep.subr.bf16.mxu0 0
          %409 = vmatpush1.bf16.msra.mxu0 %v390
          %410 = vmatprep.subr.bf16.mxu0 0
          %411 = vmatpush2.bf16.msra.mxu0 0
          %412 = vmatprep.subr.bf16.mxu0 0
          %413 = vmatpush2.bf16.msra.mxu0 0
          %414 = vmatprep.subr.bf16.mxu0 0
          %415 = vmatpush2.bf16.msra.mxu0 0
          %416 = vmatprep.subr.bf16.mxu0 0
          %417 = vmatpush2.bf16.msra.mxu0 0
          %418 = vmatprep.subr.bf16.mxu0 0
          %419 = vmatpush2.bf16.msra.mxu0 0
          %420 = vmatprep.subr.bf16.mxu0 0
          %421 = vmatpush2.bf16.msra.mxu0 0
          %422 = vmatprep.subr.bf16.mxu0 0
          %423 = vmatpush2.bf16.msra.mxu0 0
          %424 = vmatprep.subr.bf16.mxu0 0
          %425 = vmatpush2.bf16.msra.mxu0 0
          %426 = vmatprep.mubr.bf16.mxu0 0
          %427 = vmatmul.mubr.bf16.gmra.mxu0 %v323
          %v428 = vpop.f32.mrf.mxu0
          %v429 = vadd.f32 0.0, %v428
          %v430 = vpop.f32.mrf.mxu0
          %v431 = vpop.f32.mrf.mxu0
          %v432 = vadd.f32 0.0, %v431
          %v433 = vpop.f32.mrf.mxu0
          %434 = vdwg.mxu0
          %v435 = vpack.c.bf16 %v432, %v429
          %v437 = vunpack.c.l.b16 %v435
          %v438 = vunpack.c.h.b16 %v435
          %v439 = vpack.c.b16 %v437, %v437
          %v440 = vpack.c.b16 %v438, %v438
          %s443 = scalar_lea.vmem [#allocation2], 8
          %444 = vst.msk [vmem:[%s443] sm:$0xf] %vm374, %v439
          %445 = vst.msk [vmem:[%s443 + $0x4] sm:$0xf] %vm374, %v440
          %s446 = scalar_lea.vmem %s2, 32
          %v447 = vld [vmem:[%s446] sm:$0xf]
          %v448 = vld [vmem:[%s446 + $0x4] sm:$0xf]
          %v449 = vld [vmem:[%s446 + $0x8] sm:$0xf]
          %v450 = vld [vmem:[%s446 + $0xc] sm:$0xf]
          %v455 = vunpack.c.l.b16 %v447
          %v456 = vunpack.c.l.b16 %v448
          %v457 = vunpack.c.l.b16 %v449
          %v458 = vunpack.c.l.b16 %v450
          %v459 = vpack.c.b16 %v456, %v455
          %v460 = vpack.c.b16 %v458, %v457
          %463 = vmatprep.subr.bf16.mxu0 0
          %464 = vmatpush1.bf16.msra.mxu0 0
          %465 = vmatprep.subr.bf16.mxu0 0
          %466 = vmatpush1.bf16.msra.mxu0 0
          %467 = vmatprep.subr.bf16.mxu0 0
          %468 = vmatpush1.bf16.msra.mxu0 0
          %469 = vmatprep.subr.bf16.mxu0 0
          %470 = vmatpush1.bf16.msra.mxu0 0
          %471 = vmatprep.subr.bf16.mxu0 0
          %472 = vmatpush1.bf16.msra.mxu0 0
          %473 = vmatprep.subr.bf16.mxu0 0
          %474 = vmatpush1.bf16.msra.mxu0 0
          %475 = vmatprep.subr.bf16.mxu0 0
          %476 = vmatpush1.bf16.msra.mxu0 %v460
          %477 = vmatprep.subr.bf16.mxu0 0
          %478 = vmatpush1.bf16.msra.mxu0 %v459
          %479 = vmatprep.subr.bf16.mxu0 0
          %480 = vmatpush2.bf16.msra.mxu0 0
          %481 = vmatprep.subr.bf16.mxu0 0
          %482 = vmatpush2.bf16.msra.mxu0 0
          %483 = vmatprep.subr.bf16.mxu0 0
          %484 = vmatpush2.bf16.msra.mxu0 0
          %485 = vmatprep.subr.bf16.mxu0 0
          %486 = vmatpush2.bf16.msra.mxu0 0
          %487 = vmatprep.subr.bf16.mxu0 0
          %488 = vmatpush2.bf16.msra.mxu0 0
          %489 = vmatprep.subr.bf16.mxu0 0
          %490 = vmatpush2.bf16.msra.mxu0 0
          %491 = vmatprep.subr.bf16.mxu0 0
          %492 = vmatpush2.bf16.msra.mxu0 0
          %493 = vmatprep.subr.bf16.mxu0 0
          %494 = vmatpush2.bf16.msra.mxu0 0
          %495 = vmatprep.mubr.bf16.mxu0 0
          %496 = vmatmul.mubr.bf16.gmra.mxu0 %v323
          %v497 = vpop.f32.mrf.mxu0
          %v498 = vadd.f32 0.0, %v497
          %v499 = vpop.f32.mrf.mxu0
          %v500 = vpop.f32.mrf.mxu0
          %v501 = vadd.f32 0.0, %v500
          %v502 = vpop.f32.mrf.mxu0
          %503 = vdwg.mxu0
          %v504 = vpack.c.bf16 %v501, %v498
          %v506 = vunpack.c.l.b16 %v504
          %v507 = vunpack.c.h.b16 %v504
          %v508 = vpack.c.b16 %v506, %v506
          %v509 = vpack.c.b16 %v507, %v507
          %s512 = scalar_lea.vmem [#allocation2], 16
          %513 = vst.msk [vmem:[%s512] sm:$0xf] %vm374, %v508
          %514 = vst.msk [vmem:[%s512 + $0x4] sm:$0xf] %vm374, %v509
          %s515 = scalar_lea.vmem %s2, 48
          %v516 = vld [vmem:[%s515] sm:$0xf]
          %v517 = vld [vmem:[%s515 + $0x4] sm:$0xf]
          %v518 = vld [vmem:[%s515 + $0x8] sm:$0xf]
          %v519 = vld [vmem:[%s515 + $0xc] sm:$0xf]
          %v524 = vunpack.c.l.b16 %v516
          %v525 = vunpack.c.l.b16 %v517
          %v526 = vunpack.c.l.b16 %v518
          %v527 = vunpack.c.l.b16 %v519
          %v528 = vpack.c.b16 %v525, %v524
          %v529 = vpack.c.b16 %v527, %v526
          %532 = vmatprep.subr.bf16.mxu0 0
          %533 = vmatpush1.bf16.msra.mxu0 0
          %534 = vmatprep.subr.bf16.mxu0 0
          %535 = vmatpush1.bf16.msra.mxu0 0
          %536 = vmatprep.subr.bf16.mxu0 0
          %537 = vmatpush1.bf16.msra.mxu0 0
          %538 = vmatprep.subr.bf16.mxu0 0
          %539 = vmatpush1.bf16.msra.mxu0 0
          %540 = vmatprep.subr.bf16.mxu0 0
          %541 = vmatpush1.bf16.msra.mxu0 0
          %542 = vmatprep.subr.bf16.mxu0 0
          %543 = vmatpush1.bf16.msra.mxu0 0
          %544 = vmatprep.subr.bf16.mxu0 0
          %545 = vmatpush1.bf16.msra.mxu0 %v529
          %546 = vmatprep.subr.bf16.mxu0 0
          %547 = vmatpush1.bf16.msra.mxu0 %v528
          %548 = vmatprep.subr.bf16.mxu0 0
          %549 = vmatpush2.bf16.msra.mxu0 0
          %550 = vmatprep.subr.bf16.mxu0 0
          %551 = vmatpush2.bf16.msra.mxu0 0
          %552 = vmatprep.subr.bf16.mxu0 0
          %553 = vmatpush2.bf16.msra.mxu0 0
          %554 = vmatprep.subr.bf16.mxu0 0
          %555 = vmatpush2.bf16.msra.mxu0 0
          %556 = vmatprep.subr.bf16.mxu0 0
          %557 = vmatpush2.bf16.msra.mxu0 0
          %558 = vmatprep.subr.bf16.mxu0 0
          %559 = vmatpush2.bf16.msra.mxu0 0
          %560 = vmatprep.subr.bf16.mxu0 0
          %561 = vmatpush2.bf16.msra.mxu0 0
          %562 = vmatprep.subr.bf16.mxu0 0
          %563 = vmatpush2.bf16.msra.mxu0 0
          %564 = vmatprep.mubr.bf16.mxu0 0
          %565 = vmatmul.mubr.bf16.gmra.mxu0 %v323
          %v566 = vpop.f32.mrf.mxu0
          %v567 = vadd.f32 0.0, %v566
          %v568 = vpop.f32.mrf.mxu0
          %v569 = vpop.f32.mrf.mxu0
          %v570 = vadd.f32 0.0, %v569
          %v571 = vpop.f32.mrf.mxu0
          %572 = vdwg.mxu0
          %v573 = vpack.c.bf16 %v570, %v567
          %v575 = vunpack.c.l.b16 %v573
          %v576 = vunpack.c.h.b16 %v573
          %v577 = vpack.c.b16 %v575, %v575
          %v578 = vpack.c.b16 %v576, %v576
          %s581 = scalar_lea.vmem [#allocation2], 24
          %582 = vst.msk [vmem:[%s581] sm:$0xf] %vm374, %v577
          %583 = vst.msk [vmem:[%s581 + $0x4] sm:$0xf] %vm374, %v578
          %vm584 = vcmask 7168
          %585 = vst.msk [vmem:[#allocation3] sm:$0xff] %vm584, -inf
          %586 = vst.msk [vmem:[#allocation3 + $0x8] sm:$0xff] %vm584, -inf
          %587 = vst.msk [vmem:[#allocation3 + $0x10] sm:$0xff] %vm584, -inf
          %588 = vst.msk [vmem:[#allocation3 + $0x18] sm:$0xff] %vm584, -inf
          %589 = vst.msk [vmem:[#allocation3 + $0x20] sm:$0xff] %vm584, -inf
          %590 = vst.msk [vmem:[#allocation3 + $0x28] sm:$0xff] %vm584, -inf
          %591 = vst.msk [vmem:[#allocation3 + $0x30] sm:$0xff] %vm584, -inf
          %592 = vst.msk [vmem:[#allocation3 + $0x38] sm:$0xff] %vm584, -inf
          %593 = vst.msk [vmem:[#allocation4] sm:$0xff] %vm584, 0.0
          %594 = vst.msk [vmem:[#allocation4 + $0x8] sm:$0xff] %vm584, 0.0
          %595 = vst.msk [vmem:[#allocation4 + $0x10] sm:$0xff] %vm584, 0.0
          %596 = vst.msk [vmem:[#allocation4 + $0x18] sm:$0xff] %vm584, 0.0
          %597 = vst.msk [vmem:[#allocation4 + $0x20] sm:$0xff] %vm584, 0.0
          %598 = vst.msk [vmem:[#allocation4 + $0x28] sm:$0xff] %vm584, 0.0
          %599 = vst.msk [vmem:[#allocation4 + $0x30] sm:$0xff] %vm584, 0.0
          %600 = vst.msk [vmem:[#allocation4 + $0x38] sm:$0xff] %vm584, 0.0
          %vm601 = vcmask 64512
          %602 = vst.msk [vmem:[#allocation5] sm:$0xff] %vm601, 0.0
          %603 = vst.msk [vmem:[#allocation5 + $0x8] sm:$0xff] %vm601, 0.0
          %604 = vst.msk [vmem:[#allocation5 + $0x10] sm:$0xff] %vm601, 0.0
          %605 = vst.msk [vmem:[#allocation5 + $0x18] sm:$0xff] %vm601, 0.0
          %606 = vst.msk [vmem:[#allocation5 + $0x20] sm:$0xff] %vm601, 0.0
          %607 = vst.msk [vmem:[#allocation5 + $0x28] sm:$0xff] %vm601, 0.0
          %608 = vst.msk [vmem:[#allocation5 + $0x30] sm:$0xff] %vm601, 0.0
          %609 = vst.msk [vmem:[#allocation5 + $0x38] sm:$0xff] %vm601, 0.0
        $region44: #{tpu_custom_call.1} parent=39 // pred_fallthru
          _
        %v610 = vld [vmem:[%s294] sm:$0xff]
        %v611 = vld [vmem:[%s294 + $0x8] sm:$0xff]
        %v612 = vpack.c.bf16 %v611, %v610
        %v613 = vld [vmem:[%s3] sm:$0xf]
        %v614 = vld [vmem:[%s3 + $0x4] sm:$0xf]
        %v615 = vld [vmem:[%s3 + $0x8] sm:$0xf]
        %v616 = vld [vmem:[%s3 + $0xc] sm:$0xf]
        %v621 = vunpack.c.l.b16 %v613
        %v622 = vunpack.c.l.b16 %v614
        %v623 = vunpack.c.l.b16 %v615
        %v624 = vunpack.c.l.b16 %v616
        %v625 = vpack.c.b16 %v622, %v621
        %v626 = vpack.c.b16 %v624, %v623
        %vm629 = vcmask 261120
        %v631 = vsel %vm629, %v612, 0
        %633 = vmatprep.subr.bf16.mxu0 0
        %634 = vmatpush1.bf16.msra.mxu0 0
        %635 = vmatprep.subr.bf16.mxu0 0
        %636 = vmatpush1.bf16.msra.mxu0 0
        %637 = vmatprep.subr.bf16.mxu0 0
        %638 = vmatpush1.bf16.msra.mxu0 0
        %639 = vmatprep.subr.bf16.mxu0 0
        %640 = vmatpush1.bf16.msra.mxu0 0
        %641 = vmatprep.subr.bf16.mxu0 0
        %642 = vmatpush1.bf16.msra.mxu0 0
        %643 = vmatprep.subr.bf16.mxu0 0
        %644 = vmatpush1.bf16.msra.mxu0 0
        %645 = vmatprep.subr.bf16.mxu0 0
        %646 = vmatpush1.bf16.msra.mxu0 %v626
        %647 = vmatprep.subr.bf16.mxu0 0
        %648 = vmatpush1.bf16.msra.mxu0 %v625
        %649 = vmatprep.subr.bf16.mxu0 0
        %650 = vmatpush2.bf16.msra.mxu0 0
        %651 = vmatprep.subr.bf16.mxu0 0
        %652 = vmatpush2.bf16.msra.mxu0 0
        %653 = vmatprep.subr.bf16.mxu0 0
        %654 = vmatpush2.bf16.msra.mxu0 0
        %655 = vmatprep.subr.bf16.mxu0 0
        %656 = vmatpush2.bf16.msra.mxu0 0
        %657 = vmatprep.subr.bf16.mxu0 0
        %658 = vmatpush2.bf16.msra.mxu0 0
        %659 = vmatprep.subr.bf16.mxu0 0
        %660 = vmatpush2.bf16.msra.mxu0 0
        %661 = vmatprep.subr.bf16.mxu0 0
        %662 = vmatpush2.bf16.msra.mxu0 0
        %663 = vmatprep.subr.bf16.mxu0 0
        %664 = vmatpush2.bf16.msra.mxu0 0
        %665 = vmatprep.mubr.bf16.mxu0 0
        %666 = vmatmul.mubr.bf16.gmra.mxu0 %v631
        %v667 = vpop.f32.mrf.mxu0
        %v668 = vadd.f32 0.0, %v667
        %v669 = vpop.f32.mrf.mxu0
        %v670 = vpop.f32.mrf.mxu0
        %v671 = vadd.f32 0.0, %v670
        %v672 = vpop.f32.mrf.mxu0
        %673 = vdwg.mxu0
        %v674 = vpack.c.bf16 %v671, %v668
        %v675 = vld [vmem:[%s4] sm:$0xf]
        %v676 = vld [vmem:[%s4 + $0x4] sm:$0xf]
        %v677 = vld [vmem:[%s4 + $0x8] sm:$0xf]
        %v678 = vld [vmem:[%s4 + $0xc] sm:$0xf]
        %v683 = vunpack.c.l.b16 %v675
        %v684 = vunpack.c.l.b16 %v676
        %v685 = vunpack.c.l.b16 %v677
        %v686 = vunpack.c.l.b16 %v678
        %v687 = vpack.c.b16 %v684, %v683
        %v688 = vpack.c.b16 %v686, %v685
        %691 = vmatprep.subr.bf16.mxu0 0
        %692 = vmatpush1.bf16.msra.mxu0 0
        %693 = vmatprep.subr.bf16.mxu0 0
        %694 = vmatpush1.bf16.msra.mxu0 0
        %695 = vmatprep.subr.bf16.mxu0 0
        %696 = vmatpush1.bf16.msra.mxu0 0
        %697 = vmatprep.subr.bf16.mxu0 0
        %698 = vmatpush1.bf16.msra.mxu0 0
        %699 = vmatprep.subr.bf16.mxu0 0
        %700 = vmatpush1.bf16.msra.mxu0 0
        %701 = vmatprep.subr.bf16.mxu0 0
        %702 = vmatpush1.bf16.msra.mxu0 0
        %703 = vmatprep.subr.bf16.mxu0 0
        %704 = vmatpush1.bf16.msra.mxu0 %v688
        %705 = vmatprep.subr.bf16.mxu0 0
        %706 = vmatpush1.bf16.msra.mxu0 %v687
        %707 = vmatprep.subr.bf16.mxu0 0
        %708 = vmatpush2.bf16.msra.mxu0 0
        %709 = vmatprep.subr.bf16.mxu0 0
        %710 = vmatpush2.bf16.msra.mxu0 0
        %711 = vmatprep.subr.bf16.mxu0 0
        %712 = vmatpush2.bf16.msra.mxu0 0
        %713 = vmatprep.subr.bf16.mxu0 0
        %714 = vmatpush2.bf16.msra.mxu0 0
        %715 = vmatprep.subr.bf16.mxu0 0
        %716 = vmatpush2.bf16.msra.mxu0 0
        %717 = vmatprep.subr.bf16.mxu0 0
        %718 = vmatpush2.bf16.msra.mxu0 0
        %719 = vmatprep.subr.bf16.mxu0 0
        %720 = vmatpush2.bf16.msra.mxu0 0
        %721 = vmatprep.subr.bf16.mxu0 0
        %722 = vmatpush2.bf16.msra.mxu0 0
        %723 = vmatprep.mubr.bf16.mxu0 0
        %724 = vmatmul.mubr.bf16.gmra.mxu0 %v631
        %v725 = vpop.f32.mrf.mxu0
        %v726 = vadd.f32 0.0, %v725
        %v727 = vpop.f32.mrf.mxu0
        %v728 = vpop.f32.mrf.mxu0
        %v729 = vadd.f32 0.0, %v728
        %v730 = vpop.f32.mrf.mxu0
        %731 = vdwg.mxu0
        %v732 = vpack.c.bf16 %v729, %v726
        %v733 = vld [vmem:[#allocation2] sm:$0xf]
        %v734 = vld [vmem:[#allocation2 + $0x4] sm:$0xf]
        %v737 = vunpack.c.l.b16 %v733
        %v738 = vunpack.c.l.b16 %v734
        %v739 = vpack.c.b16 %v738, %v737
        %vm740 = vcmask 64512
        %v742 = vsel %vm740, %v739, 0
        %v745 = vsel %vm740, %v674, 0
        %747 = vmatprep.subr.bf16.mxu0 0
        %748 = vmatpush1.bf16.xpose.msra.mxu0 0
        %749 = vmatprep.subr.bf16.mxu0 0
        %750 = vmatpush1.bf16.xpose.msra.mxu0 0
        %751 = vmatprep.subr.bf16.mxu0 0
        %752 = vmatpush1.bf16.xpose.msra.mxu0 0
        %753 = vmatprep.subr.bf16.mxu0 0
        %754 = vmatpush1.bf16.xpose.msra.mxu0 0
        %755 = vmatprep.subr.bf16.mxu0 0
        %756 = vmatpush1.bf16.xpose.msra.mxu0 0
        %757 = vmatprep.subr.bf16.mxu0 0
        %758 = vmatpush1.bf16.xpose.msra.mxu0 0
        %759 = vmatprep.subr.bf16.mxu0 0
        %760 = vmatpush1.bf16.xpose.msra.mxu0 0
        %761 = vmatprep.subr.bf16.mxu0 0
        %762 = vmatpush1.bf16.xpose.msra.mxu0 %v745
        %763 = vmatprep.subr.bf16.mxu0 0
        %764 = vmatpush2.bf16.xpose.msra.mxu0 0
        %765 = vmatprep.subr.bf16.mxu0 0
        %766 = vmatpush2.bf16.xpose.msra.mxu0 0
        %767 = vmatprep.subr.bf16.mxu0 0
        %768 = vmatpush2.bf16.xpose.msra.mxu0 0
        %769 = vmatprep.subr.bf16.mxu0 0
        %770 = vmatpush2.bf16.xpose.msra.mxu0 0
        %771 = vmatprep.subr.bf16.mxu0 0
        %772 = vmatpush2.bf16.xpose.msra.mxu0 0
        %773 = vmatprep.subr.bf16.mxu0 0
        %774 = vmatpush2.bf16.xpose.msra.mxu0 0
        %775 = vmatprep.subr.bf16.mxu0 0
        %776 = vmatpush2.bf16.xpose.msra.mxu0 0
        %777 = vmatprep.subr.bf16.mxu0 0
        %778 = vmatpush2.bf16.xpose.msra.mxu0 0
        %779 = vmatprep.mubr.bf16.mxu0 0
        %780 = vmatmul.mubr.bf16.gmra.mxu0 %v742
        %v781 = vpop.f32.mrf.mxu0
        %v782 = vadd.f32 0.0, %v781
        %v783 = vpop.f32.mrf.mxu0
        %v784 = vpop.f32.mrf.mxu0
        %v785 = vadd.f32 0.0, %v784
        %v786 = vpop.f32.mrf.mxu0
        %787 = vdwg.mxu0
        %v788 = vld [vmem:[#allocation3] sm:$0xff]
        %v789 = vld [vmem:[#allocation3 + $0x8] sm:$0xff]
        %vm790 = vcmask 130048
        %v791 = vsel %vm790, %v782, -inf
        %792 = vmax.xlane.f32.xlu0 %v791
        %v793 = vpop.xlane.xlu0 %792
        %v794 = vsel %vm790, %v785, -inf
        %795 = vmax.xlane.f32.xlu0 %v794
        %v796 = vpop.xlane.xlu0 %795
        %v797 = vmax.f32 %v788, %v793
        %v798 = vmax.f32 %v789, %v796
        %v799 = vsub.f32 %v788, %v797
        %v800 = vsub.f32 %v789, %v798
        %v801 = vmul.f32 %v799, 1.442695
        %v802 = vpow.pop %v801
        %v803 = vmul.f32 %v800, 1.442695
        %v804 = vpow.pop %v803
        %806 = vset.pattern.permute.xlu0 0
        %807 = vperm.xlu0 %806, %v797
        %v808 = vpop.permute.xlu0 %807
        %811 = vset.pattern.permute.xlu0 0
        %812 = vperm.xlu0 %811, %v798
        %v813 = vpop.permute.xlu0 %812
        %v815 = vsub.f32 %v782, %v808
        %v816 = vsub.f32 %v785, %v813
        %v817 = vmul.f32 %v815, 1.442695
        %v818 = vpow.pop %v817
        %v819 = vmul.f32 %v816, 1.442695
        %v820 = vpow.pop %v819
        %v821 = vld [vmem:[#allocation4] sm:$0xff]
        %v822 = vld [vmem:[#allocation4 + $0x8] sm:$0xff]
        %v823 = vmul.f32 %v802, %v821
        %v824 = vmul.f32 %v804, %v822
        %v825 = vsel %vm790, %v818, 0.0
        %826 = vadd.xlane.f32.xlu0 %v825
        %v827 = vpop.xlane.xlu0 %826
        %v828 = vsel %vm790, %v820, 0.0
        %829 = vadd.xlane.f32.xlu0 %v828
        %v830 = vpop.xlane.xlu0 %829
        %v831 = vadd.f32 %v823, %v827
        %v832 = vadd.f32 %v824, %v830
        %vm833 = vcmask 7168
        %834 = vst.msk [vmem:[#allocation4] sm:$0xff] %vm833, %v831
        %835 = vst.msk [vmem:[#allocation4 + $0x8] sm:$0xff] %vm833, %v832
        %v836 = vld [vmem:[#allocation5] sm:$0xff]
        %v837 = vld [vmem:[#allocation5 + $0x8] sm:$0xff]
        %839 = vset.pattern.permute.xlu0 0
        %840 = vperm.xlu0 %839, %v802
        %v841 = vpop.permute.xlu0 %840
        %844 = vset.pattern.permute.xlu0 0
        %845 = vperm.xlu0 %844, %v804
        %v846 = vpop.permute.xlu0 %845
        %v848 = vmul.f32 %v841, %v836
        %v849 = vmul.f32 %v846, %v837
        %v850 = vpack.c.bf16 %v820, %v818
        %v852 = vsel %vm790, %v850, 0
        %854 = vmatprep.subr.bf16.mxu0 0
        %855 = vmatpush1.bf16.msra.mxu0 0
        %856 = vmatprep.subr.bf16.mxu0 0
        %857 = vmatpush1.bf16.msra.mxu0 0
        %858 = vmatprep.subr.bf16.mxu0 0
        %859 = vmatpush1.bf16.msra.mxu0 0
        %860 = vmatprep.subr.bf16.mxu0 0
        %861 = vmatpush1.bf16.msra.mxu0 0
        %862 = vmatprep.subr.bf16.mxu0 0
        %863 = vmatpush1.bf16.msra.mxu0 0
        %864 = vmatprep.subr.bf16.mxu0 0
        %865 = vmatpush1.bf16.msra.mxu0 0
        %866 = vmatprep.subr.bf16.mxu0 0
        %867 = vmatpush1.bf16.msra.mxu0 0
        %868 = vmatprep.subr.bf16.mxu0 0
        %869 = vmatpush1.bf16.msra.mxu0 %v732
        %870 = vmatprep.subr.bf16.mxu0 0
        %871 = vmatpush2.bf16.msra.mxu0 0
        %872 = vmatprep.subr.bf16.mxu0 0
        %873 = vmatpush2.bf16.msra.mxu0 0
        %874 = vmatprep.subr.bf16.mxu0 0
        %875 = vmatpush2.bf16.msra.mxu0 0
        %876 = vmatprep.subr.bf16.mxu0 0
        %877 = vmatpush2.bf16.msra.mxu0 0
        %878 = vmatprep.subr.bf16.mxu0 0
        %879 = vmatpush2.bf16.msra.mxu0 0
        %880 = vmatprep.subr.bf16.mxu0 0
        %881 = vmatpush2.bf16.msra.mxu0 0
        %882 = vmatprep.subr.bf16.mxu0 0
        %883 = vmatpush2.bf16.msra.mxu0 0
        %884 = vmatprep.subr.bf16.mxu0 0
        %885 = vmatpush2.bf16.msra.mxu0 0
        %886 = vmatprep.mubr.bf16.mxu0 0
        %887 = vmatmul.mubr.bf16.gmra.mxu0 %v852
        %v888 = vpop.f32.mrf.mxu0
        %v889 = vadd.f32 0.0, %v888
        %v890 = vpop.f32.mrf.mxu0
        %v891 = vpop.f32.mrf.mxu0
        %v892 = vadd.f32 0.0, %v891
        %v893 = vpop.f32.mrf.mxu0
        %894 = vdwg.mxu0
        %v895 = vadd.f32 %v848, %v889
        %v896 = vadd.f32 %v849, %v892
        %897 = vst.msk [vmem:[#allocation5] sm:$0xff] %vm740, %v895
        %898 = vst.msk [vmem:[#allocation5 + $0x8] sm:$0xff] %vm740, %v896
        %899 = vst.msk [vmem:[#allocation3] sm:$0xff] %vm833, %v797
        %900 = vst.msk [vmem:[#allocation3 + $0x8] sm:$0xff] %vm833, %v798
        %s901 = scalar_lea.vmem %s3, 16
        %v902 = vld [vmem:[%s901] sm:$0xf]
        %v903 = vld [vmem:[%s901 + $0x4] sm:$0xf]
        %v904 = vld [vmem:[%s901 + $0x8] sm:$0xf]
        %v905 = vld [vmem:[%s901 + $0xc] sm:$0xf]
        %v910 = vunpack.c.l.b16 %v902
        %v911 = vunpack.c.l.b16 %v903
        %v912 = vunpack.c.l.b16 %v904
        %v913 = vunpack.c.l.b16 %v905
        %v914 = vpack.c.b16 %v911, %v910
        %v915 = vpack.c.b16 %v913, %v912
        %918 = vmatprep.subr.bf16.mxu0 0
        %919 = vmatpush1.bf16.msra.mxu0 0
        %920 = vmatprep.subr.bf16.mxu0 0
        %921 = vmatpush1.bf16.msra.mxu0 0
        %922 = vmatprep.subr.bf16.mxu0 0
        %923 = vmatpush1.bf16.msra.mxu0 0
        %924 = vmatprep.subr.bf16.mxu0 0
        %925 = vmatpush1.bf16.msra.mxu0 0
        %926 = vmatprep.subr.bf16.mxu0 0
        %927 = vmatpush1.bf16.msra.mxu0 0
        %928 = vmatprep.subr.bf16.mxu0 0
        %929 = vmatpush1.bf16.msra.mxu0 0
        %930 = vmatprep.subr.bf16.mxu0 0
        %931 = vmatpush1.bf16.msra.mxu0 %v915
        %932 = vmatprep.subr.bf16.mxu0 0
        %933 = vmatpush1.bf16.msra.mxu0 %v914
        %934 = vmatprep.subr.bf16.mxu0 0
        %935 = vmatpush2.bf16.msra.mxu0 0
        %936 = vmatprep.subr.bf16.mxu0 0
        %937 = vmatpush2.bf16.msra.mxu0 0
        %938 = vmatprep.subr.bf16.mxu0 0
        %939 = vmatpush2.bf16.msra.mxu0 0
        %940 = vmatprep.subr.bf16.mxu0 0
        %941 = vmatpush2.bf16.msra.mxu0 0
        %942 = vmatprep.subr.bf16.mxu0 0
        %943 = vmatpush2.bf16.msra.mxu0 0
        %944 = vmatprep.subr.bf16.mxu0 0
        %945 = vmatpush2.bf16.msra.mxu0 0
        %946 = vmatprep.subr.bf16.mxu0 0
        %947 = vmatpush2.bf16.msra.mxu0 0
        %948 = vmatprep.subr.bf16.mxu0 0
        %949 = vmatpush2.bf16.msra.mxu0 0
        %950 = vmatprep.mubr.bf16.mxu0 0
        %951 = vmatmul.mubr.bf16.gmra.mxu0 %v631
        %v952 = vpop.f32.mrf.mxu0
        %v953 = vadd.f32 0.0, %v952
        %v954 = vpop.f32.mrf.mxu0
        %v955 = vpop.f32.mrf.mxu0
        %v956 = vadd.f32 0.0, %v955
        %v957 = vpop.f32.mrf.mxu0
        %958 = vdwg.mxu0
        %v959 = vpack.c.bf16 %v956, %v953
        %s960 = scalar_lea.vmem %s4, 16
        %v961 = vld [vmem:[%s960] sm:$0xf]
        %v962 = vld [vmem:[%s960 + $0x4] sm:$0xf]
        %v963 = vld [vmem:[%s960 + $0x8] sm:$0xf]
        %v964 = vld [vmem:[%s960 + $0xc] sm:$0xf]
        %v969 = vunpack.c.l.b16 %v961
        %v970 = vunpack.c.l.b16 %v962
        %v971 = vunpack.c.l.b16 %v963
        %v972 = vunpack.c.l.b16 %v964
        %v973 = vpack.c.b16 %v970, %v969
        %v974 = vpack.c.b16 %v972, %v971
        %977 = vmatprep.subr.bf16.mxu0 0
        %978 = vmatpush1.bf16.msra.mxu0 0
        %979 = vmatprep.subr.bf16.mxu0 0
        %980 = vmatpush1.bf16.msra.mxu0 0
        %981 = vmatprep.subr.bf16.mxu0 0
        %982 = vmatpush1.bf16.msra.mxu0 0
        %983 = vmatprep.subr.bf16.mxu0 0
        %984 = vmatpush1.bf16.msra.mxu0 0
        %985 = vmatprep.subr.bf16.mxu0 0
        %986 = vmatpush1.bf16.msra.mxu0 0
        %987 = vmatprep.subr.bf16.mxu0 0
        %988 = vmatpush1.bf16.msra.mxu0 0
        %989 = vmatprep.subr.bf16.mxu0 0
        %990 = vmatpush1.bf16.msra.mxu0 %v974
        %991 = vmatprep.subr.bf16.mxu0 0
        %992 = vmatpush1.bf16.msra.mxu0 %v973
        %993 = vmatprep.subr.bf16.mxu0 0
        %994 = vmatpush2.bf16.msra.mxu0 0
        %995 = vmatprep.subr.bf16.mxu0 0
        %996 = vmatpush2.bf16.msra.mxu0 0
        %997 = vmatprep.subr.bf16.mxu0 0
        %998 = vmatpush2.bf16.msra.mxu0 0
        %999 = vmatprep.subr.bf16.mxu0 0
        %1000 = vmatpush2.bf16.msra.mxu0 0
        %1001 = vmatprep.subr.bf16.mxu0 0
        %1002 = vmatpush2.bf16.msra.mxu0 0
        %1003 = vmatprep.subr.bf16.mxu0 0
        %1004 = vmatpush2.bf16.msra.mxu0 0
        %1005 = vmatprep.subr.bf16.mxu0 0
        %1006 = vmatpush2.bf16.msra.mxu0 0
        %1007 = vmatprep.subr.bf16.mxu0 0
        %1008 = vmatpush2.bf16.msra.mxu0 0
        %1009 = vmatprep.mubr.bf16.mxu0 0
        %1010 = vmatmul.mubr.bf16.gmra.mxu0 %v631
        %v1011 = vpop.f32.mrf.mxu0
        %v1012 = vadd.f32 0.0, %v1011
        %v1013 = vpop.f32.mrf.mxu0
        %v1014 = vpop.f32.mrf.mxu0
        %v1015 = vadd.f32 0.0, %v1014
        %v1016 = vpop.f32.mrf.mxu0
        %1017 = vdwg.mxu0
        %v1018 = vpack.c.bf16 %v1015, %v1012
        %s1019 = scalar_lea.vmem [#allocation2], 8
        %v1020 = vld [vmem:[%s1019] sm:$0xf]
        %v1021 = vld [vmem:[%s1019 + $0x4] sm:$0xf]
        %v1024 = vunpack.c.l.b16 %v1020
        %v1025 = vunpack.c.l.b16 %v1021
        %v1026 = vpack.c.b16 %v1025, %v1024
        %v1028 = vsel %vm740, %v1026, 0
        %v1031 = vsel %vm740, %v959, 0
        %1033 = vmatprep.subr.bf16.mxu0 0
        %1034 = vmatpush1.bf16.xpose.msra.mxu0 0
        %1035 = vmatprep.subr.bf16.mxu0 0
        %1036 = vmatpush1.bf16.xpose.msra.mxu0 0
        %1037 = vmatprep.subr.bf16.mxu0 0
        %1038 = vmatpush1.bf16.xpose.msra.mxu0 0
        %1039 = vmatprep.subr.bf16.mxu0 0
        %1040 = vmatpush1.bf16.xpose.msra.mxu0 0
        %1041 = vmatprep.subr.bf16.mxu0 0
        %1042 = vmatpush1.bf16.xpose.msra.mxu0 0
        %1043 = vmatprep.subr.bf16.mxu0 0
        %1044 = vmatpush1.bf16.xpose.msra.mxu0 0
        %1045 = vmatprep.subr.bf16.mxu0 0
        %1046 = vmatpush1.bf16.xpose.msra.mxu0 0
        %1047 = vmatprep.subr.bf16.mxu0 0
        %1048 = vmatpush1.bf16.xpose.msra.mxu0 %v1031
        %1049 = vmatprep.subr.bf16.mxu0 0
        %1050 = vmatpush2.bf16.xpose.msra.mxu0 0
        %1051 = vmatprep.subr.bf16.mxu0 0
        %1052 = vmatpush2.bf16.xpose.msra.mxu0 0
        %1053 = vmatprep.subr.bf16.mxu0 0
        %1054 = vmatpush2.bf16.xpose.msra.mxu0 0
        %1055 = vmatprep.subr.bf16.mxu0 0
        %1056 = vmatpush2.bf16.xpose.msra.mxu0 0
        %1057 = vmatprep.subr.bf16.mxu0 0
        %1058 = vmatpush2.bf16.xpose.msra.mxu0 0
        %1059 = vmatprep.subr.bf16.mxu0 0
        %1060 = vmatpush2.bf16.xpose.msra.mxu0 0
        %1061 = vmatprep.subr.bf16.mxu0 0
        %1062 = vmatpush2.bf16.xpose.msra.mxu0 0
        %1063 = vmatprep.subr.bf16.mxu0 0
        %1064 = vmatpush2.bf16.xpose.msra.mxu0 0
        %1065 = vmatprep.mubr.bf16.mxu0 0
        %1066 = vmatmul.mubr.bf16.gmra.mxu0 %v1028
        %v1067 = vpop.f32.mrf.mxu0
        %v1068 = vadd.f32 0.0, %v1067
        %v1069 = vpop.f32.mrf.mxu0
        %v1070 = vpop.f32.mrf.mxu0
        %v1071 = vadd.f32 0.0, %v1070
        %v1072 = vpop.f32.mrf.mxu0
        %1073 = vdwg.mxu0
        %s1074 = scalar_lea.vmem [#allocation3], 16
        %v1075 = vld [vmem:[%s1074] sm:$0xff]
        %v1076 = vld [vmem:[%s1074 + $0x8] sm:$0xff]
        %v1077 = vsel %vm790, %v1068, -inf
        %1078 = vmax.xlane.f32.xlu0 %v1077
        %v1079 = vpop.xlane.xlu0 %1078
        %v1080 = vsel %vm790, %v1071, -inf
        %1081 = vmax.xlane.f32.xlu0 %v1080
        %v1082 = vpop.xlane.xlu0 %1081
        %v1083 = vmax.f32 %v1075, %v1079
        %v1084 = vmax.f32 %v1076, %v1082
        %v1085 = vsub.f32 %v1075, %v1083
        %v1086 = vsub.f32 %v1076, %v1084
        %v1087 = vmul.f32 %v1085, 1.442695
        %v1088 = vpow.pop %v1087
        %v1089 = vmul.f32 %v1086, 1.442695
        %v1090 = vpow.pop %v1089
        %1092 = vset.pattern.permute.xlu0 0
        %1093 = vperm.xlu0 %1092, %v1083
        %v1094 = vpop.permute.xlu0 %1093
        %1097 = vset.pattern.permute.xlu0 0
        %1098 = vperm.xlu0 %1097, %v1084
        %v1099 = vpop.permute.xlu0 %1098
        %v1101 = vsub.f32 %v1068, %v1094
        %v1102 = vsub.f32 %v1071, %v1099
        %v1103 = vmul.f32 %v1101, 1.442695
        %v1104 = vpow.pop %v1103
        %v1105 = vmul.f32 %v1102, 1.442695
        %v1106 = vpow.pop %v1105
        %s1107 = scalar_lea.vmem [#allocation4], 16
        %v1108 = vld [vmem:[%s1107] sm:$0xff]
        %v1109 = vld [vmem:[%s1107 + $0x8] sm:$0xff]
        %v1110 = vmul.f32 %v1088, %v1108
        %v1111 = vmul.f32 %v1090, %v1109
        %v1112 = vsel %vm790, %v1104, 0.0
        %1113 = vadd.xlane.f32.xlu0 %v1112
        %v1114 = vpop.xlane.xlu0 %1113
        %v1115 = vsel %vm790, %v1106, 0.0
        %1116 = vadd.xlane.f32.xlu0 %v1115
        %v1117 = vpop.xlane.xlu0 %1116
        %v1118 = vadd.f32 %v1110, %v1114
        %v1119 = vadd.f32 %v1111, %v1117
        %1120 = vst.msk [vmem:[%s1107] sm:$0xff] %vm833, %v1118
        %1121 = vst.msk [vmem:[%s1107 + $0x8] sm:$0xff] %vm833, %v1119
        %s1122 = scalar_lea.vmem [#allocation5], 16
        %v1123 = vld [vmem:[%s1122] sm:$0xff]
        %v1124 = vld [vmem:[%s1122 + $0x8] sm:$0xff]
        %1126 = vset.pattern.permute.xlu0 0
        %1127 = vperm.xlu0 %1126, %v1088
        %v1128 = vpop.permute.xlu0 %1127
        %1131 = vset.pattern.permute.xlu0 0
        %1132 = vperm.xlu0 %1131, %v1090
        %v1133 = vpop.permute.xlu0 %1132
        %v1135 = vmul.f32 %v1128, %v1123
        %v1136 = vmul.f32 %v1133, %v1124
        %v1137 = vpack.c.bf16 %v1106, %v1104
        %v1139 = vsel %vm790, %v1137, 0
        %1141 = vmatprep.subr.bf16.mxu0 0
        %1142 = vmatpush1.bf16.msra.mxu0 0
        %1143 = vmatprep.subr.bf16.mxu0 0
        %1144 = vmatpush1.bf16.msra.mxu0 0
        %1145 = vmatprep.subr.bf16.mxu0 0
        %1146 = vmatpush1.bf16.msra.mxu0 0
        %1147 = vmatprep.subr.bf16.mxu0 0
        %1148 = vmatpush1.bf16.msra.mxu0 0
        %1149 = vmatprep.subr.bf16.mxu0 0
        %1150 = vmatpush1.bf16.msra.mxu0 0
        %1151 = vmatprep.subr.bf16.mxu0 0
        %1152 = vmatpush1.bf16.msra.mxu0 0
        %1153 = vmatprep.subr.bf16.mxu0 0
        %1154 = vmatpush1.bf16.msra.mxu0 0
        %1155 = vmatprep.subr.bf16.mxu0 0
        %1156 = vmatpush1.bf16.msra.mxu0 %v1018
        %1157 = vmatprep.subr.bf16.mxu0 0
        %1158 = vmatpush2.bf16.msra.mxu0 0
        %1159 = vmatprep.subr.bf16.mxu0 0
        %1160 = vmatpush2.bf16.msra.mxu0 0
        %1161 = vmatprep.subr.bf16.mxu0 0
        %1162 = vmatpush2.bf16.msra.mxu0 0
        %1163 = vmatprep.subr.bf16.mxu0 0
        %1164 = vmatpush2.bf16.msra.mxu0 0
        %1165 = vmatprep.subr.bf16.mxu0 0
        %1166 = vmatpush2.bf16.msra.mxu0 0
        %1167 = vmatprep.subr.bf16.mxu0 0
        %1168 = vmatpush2.bf16.msra.mxu0 0
        %1169 = vmatprep.subr.bf16.mxu0 0
        %1170 = vmatpush2.bf16.msra.mxu0 0
        %1171 = vmatprep.subr.bf16.mxu0 0
        %1172 = vmatpush2.bf16.msra.mxu0 0
        %1173 = vmatprep.mubr.bf16.mxu0 0
        %1174 = vmatmul.mubr.bf16.gmra.mxu0 %v1139
        %v1175 = vpop.f32.mrf.mxu0
        %v1176 = vadd.f32 0.0, %v1175
        %v1177 = vpop.f32.mrf.mxu0
        %v1178 = vpop.f32.mrf.mxu0
        %v1179 = vadd.f32 0.0, %v1178
        %v1180 = vpop.f32.mrf.mxu0
        %1181 = vdwg.mxu0
        %v1182 = vadd.f32 %v1135, %v1176
        %v1183 = vadd.f32 %v1136, %v1179
        %1184 = vst.msk [vmem:[%s1122] sm:$0xff] %vm740, %v1182
        %1185 = vst.msk [vmem:[%s1122 + $0x8] sm:$0xff] %vm740, %v1183
        %1186 = vst.msk [vmem:[%s1074] sm:$0xff] %vm833, %v1083
        %1187 = vst.msk [vmem:[%s1074 + $0x8] sm:$0xff] %vm833, %v1084
        %s1188 = scalar_lea.vmem %s3, 32
        %v1189 = vld [vmem:[%s1188] sm:$0xf]
        %v1190 = vld [vmem:[%s1188 + $0x4] sm:$0xf]
        %v1191 = vld [vmem:[%s1188 + $0x8] sm:$0xf]
        %v1192 = vld [vmem:[%s1188 + $0xc] sm:$0xf]
        %v1197 = vunpack.c.l.b16 %v1189
        %v1198 = vunpack.c.l.b16 %v1190
        %v1199 = vunpack.c.l.b16 %v1191
        %v1200 = vunpack.c.l.b16 %v1192
        %v1201 = vpack.c.b16 %v1198, %v1197
        %v1202 = vpack.c.b16 %v1200, %v1199
        %1205 = vmatprep.subr.bf16.mxu0 0
        %1206 = vmatpush1.bf16.msra.mxu0 0
        %1207 = vmatprep.subr.bf16.mxu0 0
        %1208 = vmatpush1.bf16.msra.mxu0 0
        %1209 = vmatprep.subr.bf16.mxu0 0
        %1210 = vmatpush1.bf16.msra.mxu0 0
        %1211 = vmatprep.subr.bf16.mxu0 0
        %1212 = vmatpush1.bf16.msra.mxu0 0
        %1213 = vmatprep.subr.bf16.mxu0 0
        %1214 = vmatpush1.bf16.msra.mxu0 0
        %1215 = vmatprep.subr.bf16.mxu0 0
        %1216 = vmatpush1.bf16.msra.mxu0 0
        %1217 = vmatprep.subr.bf16.mxu0 0
        %1218 = vmatpush1.bf16.msra.mxu0 %v1202
        %1219 = vmatprep.subr.bf16.mxu0 0
        %1220 = vmatpush1.bf16.msra.mxu0 %v1201
        %1221 = vmatprep.subr.bf16.mxu0 0
        %1222 = vmatpush2.bf16.msra.mxu0 0
        %1223 = vmatprep.subr.bf16.mxu0 0
        %1224 = vmatpush2.bf16.msra.mxu0 0
        %1225 = vmatprep.subr.bf16.mxu0 0
        %1226 = vmatpush2.bf16.msra.mxu0 0
        %1227 = vmatprep.subr.bf16.mxu0 0
        %1228 = vmatpush2.bf16.msra.mxu0 0
        %1229 = vmatprep.subr.bf16.mxu0 0
        %1230 = vmatpush2.bf16.msra.mxu0 0
        %1231 = vmatprep.subr.bf16.mxu0 0
        %1232 = vmatpush2.bf16.msra.mxu0 0
        %1233 = vmatprep.subr.bf16.mxu0 0
        %1234 = vmatpush2.bf16.msra.mxu0 0
        %1235 = vmatprep.subr.bf16.mxu0 0
        %1236 = vmatpush2.bf16.msra.mxu0 0
        %1237 = vmatprep.mubr.bf16.mxu0 0
        %1238 = vmatmul.mubr.bf16.gmra.mxu0 %v631
        %v1239 = vpop.f32.mrf.mxu0
        %v1240 = vadd.f32 0.0, %v1239
        %v1241 = vpop.f32.mrf.mxu0
        %v1242 = vpop.f32.mrf.mxu0
        %v1243 = vadd.f32 0.0, %v1242
        %v1244 = vpop.f32.mrf.mxu0
        %1245 = vdwg.mxu0
        %v1246 = vpack.c.bf16 %v1243, %v1240
        %s1247 = scalar_lea.vmem %s4, 32
        %v1248 = vld [vmem:[%s1247] sm:$0xf]
        %v1249 = vld [vmem:[%s1247 + $0x4] sm:$0xf]
        %v1250 = vld [vmem:[%s1247 + $0x8] sm:$0xf]
        %v1251 = vld [vmem:[%s1247 + $0xc] sm:$0xf]
        %v1256 = vunpack.c.l.b16 %v1248
        %v1257 = vunpack.c.l.b16 %v1249
        %v1258 = vunpack.c.l.b16 %v1250
        %v1259 = vunpack.c.l.b16 %v1251
        %v1260 = vpack.c.b16 %v1257, %v1256
        %v1261 = vpack.c.b16 %v1259, %v1258
        %1264 = vmatprep.subr.bf16.mxu0 0
        %1265 = vmatpush1.bf16.msra.mxu0 0
        %1266 = vmatprep.subr.bf16.mxu0 0
        %1267 = vmatpush1.bf16.msra.mxu0 0
        %1268 = vmatprep.subr.bf16.mxu0 0
        %1269 = vmatpush1.bf16.msra.mxu0 0
        %1270 = vmatprep.subr.bf16.mxu0 0
        %1271 = vmatpush1.bf16.msra.mxu0 0
        %1272 = vmatprep.subr.bf16.mxu0 0
        %1273 = vmatpush1.bf16.msra.mxu0 0
        %1274 = vmatprep.subr.bf16.mxu0 0
        %1275 = vmatpush1.bf16.msra.mxu0 0
        %1276 = vmatprep.subr.bf16.mxu0 0
        %1277 = vmatpush1.bf16.msra.mxu0 %v1261
        %1278 = vmatprep.subr.bf16.mxu0 0
        %1279 = vmatpush1.bf16.msra.mxu0 %v1260
        %1280 = vmatprep.subr.bf16.mxu0 0
        %1281 = vmatpush2.bf16.msra.mxu0 0
        %1282 = vmatprep.subr.bf16.mxu0 0
        %1283 = vmatpush2.bf16.msra.mxu0 0
        %1284 = vmatprep.subr.bf16.mxu0 0
        %1285 = vmatpush2.bf16.msra.mxu0 0
        %1286 = vmatprep.subr.bf16.mxu0 0
        %1287 = vmatpush2.bf16.msra.mxu0 0
        %1288 = vmatprep.subr.bf16.mxu0 0
        %1289 = vmatpush2.bf16.msra.mxu0 0
        %1290 = vmatprep.subr.bf16.mxu0 0
        %1291 = vmatpush2.bf16.msra.mxu0 0
        %1292 = vmatprep.subr.bf16.mxu0 0
        %1293 = vmatpush2.bf16.msra.mxu0 0
        %1294 = vmatprep.subr.bf16.mxu0 0
        %1295 = vmatpush2.bf16.msra.mxu0 0
        %1296 = vmatprep.mubr.bf16.mxu0 0
        %1297 = vmatmul.mubr.bf16.gmra.mxu0 %v631
        %v1298 = vpop.f32.mrf.mxu0
        %v1299 = vadd.f32 0.0, %v1298
        %v1300 = vpop.f32.mrf.mxu0
        %v1301 = vpop.f32.mrf.mxu0
        %v1302 = vadd.f32 0.0, %v1301
        %v1303 = vpop.f32.mrf.mxu0
        %1304 = vdwg.mxu0
        %v1305 = vpack.c.bf16 %v1302, %v1299
        %s1306 = scalar_lea.vmem [#allocation2], 16
        %v1307 = vld [vmem:[%s1306] sm:$0xf]
        %v1308 = vld [vmem:[%s1306 + $0x4] sm:$0xf]
        %v1311 = vunpack.c.l.b16 %v1307
        %v1312 = vunpack.c.l.b16 %v1308
        %v1313 = vpack.c.b16 %v1312, %v1311
        %v1315 = vsel %vm740, %v1313, 0
        %v1318 = vsel %vm740, %v1246, 0
        %1320 = vmatprep.subr.bf16.mxu0 0
        %1321 = vmatpush1.bf16.xpose.msra.mxu0 0
        %1322 = vmatprep.subr.bf16.mxu0 0
        %1323 = vmatpush1.bf16.xpose.msra.mxu0 0
        %1324 = vmatprep.subr.bf16.mxu0 0
        %1325 = vmatpush1.bf16.xpose.msra.mxu0 0
        %1326 = vmatprep.subr.bf16.mxu0 0
        %1327 = vmatpush1.bf16.xpose.msra.mxu0 0
        %1328 = vmatprep.subr.bf16.mxu0 0
        %1329 = vmatpush1.bf16.xpose.msra.mxu0 0
        %1330 = vmatprep.subr.bf16.mxu0 0
        %1331 = vmatpush1.bf16.xpose.msra.mxu0 0
        %1332 = vmatprep.subr.bf16.mxu0 0
        %1333 = vmatpush1.bf16.xpose.msra.mxu0 0
        %1334 = vmatprep.subr.bf16.mxu0 0
        %1335 = vmatpush1.bf16.xpose.msra.mxu0 %v1318
        %1336 = vmatprep.subr.bf16.mxu0 0
        %1337 = vmatpush2.bf16.xpose.msra.mxu0 0
        %1338 = vmatprep.subr.bf16.mxu0 0
        %1339 = vmatpush2.bf16.xpose.msra.mxu0 0
        %1340 = vmatprep.subr.bf16.mxu0 0
        %1341 = vmatpush2.bf16.xpose.msra.mxu0 0
        %1342 = vmatprep.subr.bf16.mxu0 0
        %1343 = vmatpush2.bf16.xpose.msra.mxu0 0
        %1344 = vmatprep.subr.bf16.mxu0 0
        %1345 = vmatpush2.bf16.xpose.msra.mxu0 0
        %1346 = vmatprep.subr.bf16.mxu0 0
        %1347 = vmatpush2.bf16.xpose.msra.mxu0 0
        %1348 = vmatprep.subr.bf16.mxu0 0
        %1349 = vmatpush2.bf16.xpose.msra.mxu0 0
        %1350 = vmatprep.subr.bf16.mxu0 0
        %1351 = vmatpush2.bf16.xpose.msra.mxu0 0
        %1352 = vmatprep.mubr.bf16.mxu0 0
        %1353 = vmatmul.mubr.bf16.gmra.mxu0 %v1315
        %v1354 = vpop.f32.mrf.mxu0
        %v1355 = vadd.f32 0.0, %v1354
        %v1356 = vpop.f32.mrf.mxu0
        %v1357 = vpop.f32.mrf.mxu0
        %v1358 = vadd.f32 0.0, %v1357
        %v1359 = vpop.f32.mrf.mxu0
        %1360 = vdwg.mxu0
        %s1361 = scalar_lea.vmem [#allocation3], 32
        %v1362 = vld [vmem:[%s1361] sm:$0xff]
        %v1363 = vld [vmem:[%s1361 + $0x8] sm:$0xff]
        %v1364 = vsel %vm790, %v1355, -inf
        %1365 = vmax.xlane.f32.xlu0 %v1364
        %v1366 = vpop.xlane.xlu0 %1365
        %v1367 = vsel %vm790, %v1358, -inf
        %1368 = vmax.xlane.f32.xlu0 %v1367
        %v1369 = vpop.xlane.xlu0 %1368
        %v1370 = vmax.f32 %v1362, %v1366
        %v1371 = vmax.f32 %v1363, %v1369
        %v1372 = vsub.f32 %v1362, %v1370
        %v1373 = vsub.f32 %v1363, %v1371
        %v1374 = vmul.f32 %v1372, 1.442695
        %v1375 = vpow.pop %v1374
        %v1376 = vmul.f32 %v1373, 1.442695
        %v1377 = vpow.pop %v1376
        %1379 = vset.pattern.permute.xlu0 0
        %1380 = vperm.xlu0 %1379, %v1370
        %v1381 = vpop.permute.xlu0 %1380
        %1384 = vset.pattern.permute.xlu0 0
        %1385 = vperm.xlu0 %1384, %v1371
        %v1386 = vpop.permute.xlu0 %1385
        %v1388 = vsub.f32 %v1355, %v1381
        %v1389 = vsub.f32 %v1358, %v1386
        %v1390 = vmul.f32 %v1388, 1.442695
        %v1391 = vpow.pop %v1390
        %v1392 = vmul.f32 %v1389, 1.442695
        %v1393 = vpow.pop %v1392
        %s1394 = scalar_lea.vmem [#allocation4], 32
        %v1395 = vld [vmem:[%s1394] sm:$0xff]
        %v1396 = vld [vmem:[%s1394 + $0x8] sm:$0xff]
        %v1397 = vmul.f32 %v1375, %v1395
        %v1398 = vmul.f32 %v1377, %v1396
        %v1399 = vsel %vm790, %v1391, 0.0
        %1400 = vadd.xlane.f32.xlu0 %v1399
        %v1401 = vpop.xlane.xlu0 %1400
        %v1402 = vsel %vm790, %v1393, 0.0
        %1403 = vadd.xlane.f32.xlu0 %v1402
        %v1404 = vpop.xlane.xlu0 %1403
        %v1405 = vadd.f32 %v1397, %v1401
        %v1406 = vadd.f32 %v1398, %v1404
        %1407 = vst.msk [vmem:[%s1394] sm:$0xff] %vm833, %v1405
        %1408 = vst.msk [vmem:[%s1394 + $0x8] sm:$0xff] %vm833, %v1406
        %s1409 = scalar_lea.vmem [#allocation5], 32
        %v1410 = vld [vmem:[%s1409] sm:$0xff]
        %v1411 = vld [vmem:[%s1409 + $0x8] sm:$0xff]
        %1413 = vset.pattern.permute.xlu0 0
        %1414 = vperm.xlu0 %1413, %v1375
        %v1415 = vpop.permute.xlu0 %1414
        %1418 = vset.pattern.permute.xlu0 0
        %1419 = vperm.xlu0 %1418, %v1377
        %v1420 = vpop.permute.xlu0 %1419
        %v1422 = vmul.f32 %v1415, %v1410
        %v1423 = vmul.f32 %v1420, %v1411
        %v1424 = vpack.c.bf16 %v1393, %v1391
        %v1426 = vsel %vm790, %v1424, 0
        %1428 = vmatprep.subr.bf16.mxu0 0
        %1429 = vmatpush1.bf16.msra.mxu0 0
        %1430 = vmatprep.subr.bf16.mxu0 0
        %1431 = vmatpush1.bf16.msra.mxu0 0
        %1432 = vmatprep.subr.bf16.mxu0 0
        %1433 = vmatpush1.bf16.msra.mxu0 0
        %1434 = vmatprep.subr.bf16.mxu0 0
        %1435 = vmatpush1.bf16.msra.mxu0 0
        %1436 = vmatprep.subr.bf16.mxu0 0
        %1437 = vmatpush1.bf16.msra.mxu0 0
        %1438 = vmatprep.subr.bf16.mxu0 0
        %1439 = vmatpush1.bf16.msra.mxu0 0
        %1440 = vmatprep.subr.bf16.mxu0 0
        %1441 = vmatpush1.bf16.msra.mxu0 0
        %1442 = vmatprep.subr.bf16.mxu0 0
        %1443 = vmatpush1.bf16.msra.mxu0 %v1305
        %1444 = vmatprep.subr.bf16.mxu0 0
        %1445 = vmatpush2.bf16.msra.mxu0 0
        %1446 = vmatprep.subr.bf16.mxu0 0
        %1447 = vmatpush2.bf16.msra.mxu0 0
        %1448 = vmatprep.subr.bf16.mxu0 0
        %1449 = vmatpush2.bf16.msra.mxu0 0
        %1450 = vmatprep.subr.bf16.mxu0 0
        %1451 = vmatpush2.bf16.msra.mxu0 0
        %1452 = vmatprep.subr.bf16.mxu0 0
        %1453 = vmatpush2.bf16.msra.mxu0 0
        %1454 = vmatprep.subr.bf16.mxu0 0
        %1455 = vmatpush2.bf16.msra.mxu0 0
        %1456 = vmatprep.subr.bf16.mxu0 0
        %1457 = vmatpush2.bf16.msra.mxu0 0
        %1458 = vmatprep.subr.bf16.mxu0 0
        %1459 = vmatpush2.bf16.msra.mxu0 0
        %1460 = vmatprep.mubr.bf16.mxu0 0
        %1461 = vmatmul.mubr.bf16.gmra.mxu0 %v1426
        %v1462 = vpop.f32.mrf.mxu0
        %v1463 = vadd.f32 0.0, %v1462
        %v1464 = vpop.f32.mrf.mxu0
        %v1465 = vpop.f32.mrf.mxu0
        %v1466 = vadd.f32 0.0, %v1465
        %v1467 = vpop.f32.mrf.mxu0
        %1468 = vdwg.mxu0
        %v1469 = vadd.f32 %v1422, %v1463
        %v1470 = vadd.f32 %v1423, %v1466
        %1471 = vst.msk [vmem:[%s1409] sm:$0xff] %vm740, %v1469
        %1472 = vst.msk [vmem:[%s1409 + $0x8] sm:$0xff] %vm740, %v1470
        %1473 = vst.msk [vmem:[%s1361] sm:$0xff] %vm833, %v1370
        %1474 = vst.msk [vmem:[%s1361 + $0x8] sm:$0xff] %vm833, %v1371
        %s1475 = scalar_lea.vmem %s3, 48
        %v1476 = vld [vmem:[%s1475] sm:$0xf]
        %v1477 = vld [vmem:[%s1475 + $0x4] sm:$0xf]
        %v1478 = vld [vmem:[%s1475 + $0x8] sm:$0xf]
        %v1479 = vld [vmem:[%s1475 + $0xc] sm:$0xf]
        %v1484 = vunpack.c.l.b16 %v1476
        %v1485 = vunpack.c.l.b16 %v1477
        %v1486 = vunpack.c.l.b16 %v1478
        %v1487 = vunpack.c.l.b16 %v1479
        %v1488 = vpack.c.b16 %v1485, %v1484
        %v1489 = vpack.c.b16 %v1487, %v1486
        %1492 = vmatprep.subr.bf16.mxu0 0
        %1493 = vmatpush1.bf16.msra.mxu0 0
        %1494 = vmatprep.subr.bf16.mxu0 0
        %1495 = vmatpush1.bf16.msra.mxu0 0
        %1496 = vmatprep.subr.bf16.mxu0 0
        %1497 = vmatpush1.bf16.msra.mxu0 0
        %1498 = vmatprep.subr.bf16.mxu0 0
        %1499 = vmatpush1.bf16.msra.mxu0 0
        %1500 = vmatprep.subr.bf16.mxu0 0
        %1501 = vmatpush1.bf16.msra.mxu0 0
        %1502 = vmatprep.subr.bf16.mxu0 0
        %1503 = vmatpush1.bf16.msra.mxu0 0
        %1504 = vmatprep.subr.bf16.mxu0 0
        %1505 = vmatpush1.bf16.msra.mxu0 %v1489
        %1506 = vmatprep.subr.bf16.mxu0 0
        %1507 = vmatpush1.bf16.msra.mxu0 %v1488
        %1508 = vmatprep.subr.bf16.mxu0 0
        %1509 = vmatpush2.bf16.msra.mxu0 0
        %1510 = vmatprep.subr.bf16.mxu0 0
        %1511 = vmatpush2.bf16.msra.mxu0 0
        %1512 = vmatprep.subr.bf16.mxu0 0
        %1513 = vmatpush2.bf16.msra.mxu0 0
        %1514 = vmatprep.subr.bf16.mxu0 0
        %1515 = vmatpush2.bf16.msra.mxu0 0
        %1516 = vmatprep.subr.bf16.mxu0 0
        %1517 = vmatpush2.bf16.msra.mxu0 0
        %1518 = vmatprep.subr.bf16.mxu0 0
        %1519 = vmatpush2.bf16.msra.mxu0 0
        %1520 = vmatprep.subr.bf16.mxu0 0
        %1521 = vmatpush2.bf16.msra.mxu0 0
        %1522 = vmatprep.subr.bf16.mxu0 0
        %1523 = vmatpush2.bf16.msra.mxu0 0
        %1524 = vmatprep.mubr.bf16.mxu0 0
        %1525 = vmatmul.mubr.bf16.gmra.mxu0 %v631
        %v1526 = vpop.f32.mrf.mxu0
        %v1527 = vadd.f32 0.0, %v1526
        %v1528 = vpop.f32.mrf.mxu0
        %v1529 = vpop.f32.mrf.mxu0
        %v1530 = vadd.f32 0.0, %v1529
        %v1531 = vpop.f32.mrf.mxu0
        %1532 = vdwg.mxu0
        %v1533 = vpack.c.bf16 %v1530, %v1527
        %s1534 = scalar_lea.vmem %s4, 48
        %v1535 = vld [vmem:[%s1534] sm:$0xf]
        %v1536 = vld [vmem:[%s1534 + $0x4] sm:$0xf]
        %v1537 = vld [vmem:[%s1534 + $0x8] sm:$0xf]
        %v1538 = vld [vmem:[%s1534 + $0xc] sm:$0xf]
        %v1543 = vunpack.c.l.b16 %v1535
        %v1544 = vunpack.c.l.b16 %v1536
        %v1545 = vunpack.c.l.b16 %v1537
        %v1546 = vunpack.c.l.b16 %v1538
        %v1547 = vpack.c.b16 %v1544, %v1543
        %v1548 = vpack.c.b16 %v1546, %v1545
        %1551 = vmatprep.subr.bf16.mxu0 0
        %1552 = vmatpush1.bf16.msra.mxu0 0
        %1553 = vmatprep.subr.bf16.mxu0 0
        %1554 = vmatpush1.bf16.msra.mxu0 0
        %1555 = vmatprep.subr.bf16.mxu0 0
        %1556 = vmatpush1.bf16.msra.mxu0 0
        %1557 = vmatprep.subr.bf16.mxu0 0
        %1558 = vmatpush1.bf16.msra.mxu0 0
        %1559 = vmatprep.subr.bf16.mxu0 0
        %1560 = vmatpush1.bf16.msra.mxu0 0
        %1561 = vmatprep.subr.bf16.mxu0 0
        %1562 = vmatpush1.bf16.msra.mxu0 0
        %1563 = vmatprep.subr.bf16.mxu0 0
        %1564 = vmatpush1.bf16.msra.mxu0 %v1548
        %1565 = vmatprep.subr.bf16.mxu0 0
        %1566 = vmatpush1.bf16.msra.mxu0 %v1547
        %1567 = vmatprep.subr.bf16.mxu0 0
        %1568 = vmatpush2.bf16.msra.mxu0 0
        %1569 = vmatprep.subr.bf16.mxu0 0
        %1570 = vmatpush2.bf16.msra.mxu0 0
        %1571 = vmatprep.subr.bf16.mxu0 0
        %1572 = vmatpush2.bf16.msra.mxu0 0
        %1573 = vmatprep.subr.bf16.mxu0 0
        %1574 = vmatpush2.bf16.msra.mxu0 0
        %1575 = vmatprep.subr.bf16.mxu0 0
        %1576 = vmatpush2.bf16.msra.mxu0 0
        %1577 = vmatprep.subr.bf16.mxu0 0
        %1578 = vmatpush2.bf16.msra.mxu0 0
        %1579 = vmatprep.subr.bf16.mxu0 0
        %1580 = vmatpush2.bf16.msra.mxu0 0
        %1581 = vmatprep.subr.bf16.mxu0 0
        %1582 = vmatpush2.bf16.msra.mxu0 0
        %1583 = vmatprep.mubr.bf16.mxu0 0
        %1584 = vmatmul.mubr.bf16.gmra.mxu0 %v631
        %v1585 = vpop.f32.mrf.mxu0
        %v1586 = vadd.f32 0.0, %v1585
        %v1587 = vpop.f32.mrf.mxu0
        %v1588 = vpop.f32.mrf.mxu0
        %v1589 = vadd.f32 0.0, %v1588
        %v1590 = vpop.f32.mrf.mxu0
        %1591 = vdwg.mxu0
        %v1592 = vpack.c.bf16 %v1589, %v1586
        %s1593 = scalar_lea.vmem [#allocation2], 24
        %v1594 = vld [vmem:[%s1593] sm:$0xf]
        %v1595 = vld [vmem:[%s1593 + $0x4] sm:$0xf]
        %v1598 = vunpack.c.l.b16 %v1594
        %v1599 = vunpack.c.l.b16 %v1595
        %v1600 = vpack.c.b16 %v1599, %v1598
        %v1602 = vsel %vm740, %v1600, 0
        %v1605 = vsel %vm740, %v1533, 0
        %1607 = vmatprep.subr.bf16.mxu0 0
        %1608 = vmatpush1.bf16.xpose.msra.mxu0 0
        %1609 = vmatprep.subr.bf16.mxu0 0
        %1610 = vmatpush1.bf16.xpose.msra.mxu0 0
        %1611 = vmatprep.subr.bf16.mxu0 0
        %1612 = vmatpush1.bf16.xpose.msra.mxu0 0
        %1613 = vmatprep.subr.bf16.mxu0 0
        %1614 = vmatpush1.bf16.xpose.msra.mxu0 0
        %1615 = vmatprep.subr.bf16.mxu0 0
        %1616 = vmatpush1.bf16.xpose.msra.mxu0 0
        %1617 = vmatprep.subr.bf16.mxu0 0
        %1618 = vmatpush1.bf16.xpose.msra.mxu0 0
        %1619 = vmatprep.subr.bf16.mxu0 0
        %1620 = vmatpush1.bf16.xpose.msra.mxu0 0
        %1621 = vmatprep.subr.bf16.mxu0 0
        %1622 = vmatpush1.bf16.xpose.msra.mxu0 %v1605
        %1623 = vmatprep.subr.bf16.mxu0 0
        %1624 = vmatpush2.bf16.xpose.msra.mxu0 0
        %1625 = vmatprep.subr.bf16.mxu0 0
        %1626 = vmatpush2.bf16.xpose.msra.mxu0 0
        %1627 = vmatprep.subr.bf16.mxu0 0
        %1628 = vmatpush2.bf16.xpose.msra.mxu0 0
        %1629 = vmatprep.subr.bf16.mxu0 0
        %1630 = vmatpush2.bf16.xpose.msra.mxu0 0
        %1631 = vmatprep.subr.bf16.mxu0 0
        %1632 = vmatpush2.bf16.xpose.msra.mxu0 0
        %1633 = vmatprep.subr.bf16.mxu0 0
        %1634 = vmatpush2.bf16.xpose.msra.mxu0 0
        %1635 = vmatprep.subr.bf16.mxu0 0
        %1636 = vmatpush2.bf16.xpose.msra.mxu0 0
        %1637 = vmatprep.subr.bf16.mxu0 0
        %1638 = vmatpush2.bf16.xpose.msra.mxu0 0
        %1639 = vmatprep.mubr.bf16.mxu0 0
        %1640 = vmatmul.mubr.bf16.gmra.mxu0 %v1602
        %v1641 = vpop.f32.mrf.mxu0
        %v1642 = vadd.f32 0.0, %v1641
        %v1643 = vpop.f32.mrf.mxu0
        %v1644 = vpop.f32.mrf.mxu0
        %v1645 = vadd.f32 0.0, %v1644
        %v1646 = vpop.f32.mrf.mxu0
        %1647 = vdwg.mxu0
        %s1648 = scalar_lea.vmem [#allocation3], 48
        %v1649 = vld [vmem:[%s1648] sm:$0xff]
        %v1650 = vld [vmem:[%s1648 + $0x8] sm:$0xff]
        %v1651 = vsel %vm790, %v1642, -inf
        %1652 = vmax.xlane.f32.xlu0 %v1651
        %v1653 = vpop.xlane.xlu0 %1652
        %v1654 = vsel %vm790, %v1645, -inf
        %1655 = vmax.xlane.f32.xlu0 %v1654
        %v1656 = vpop.xlane.xlu0 %1655
        %v1657 = vmax.f32 %v1649, %v1653
        %v1658 = vmax.f32 %v1650, %v1656
        %v1659 = vsub.f32 %v1649, %v1657
        %v1660 = vsub.f32 %v1650, %v1658
        %v1661 = vmul.f32 %v1659, 1.442695
        %v1662 = vpow.pop %v1661
        %v1663 = vmul.f32 %v1660, 1.442695
        %v1664 = vpow.pop %v1663
        %1666 = vset.pattern.permute.xlu0 0
        %1667 = vperm.xlu0 %1666, %v1657
        %v1668 = vpop.permute.xlu0 %1667
        %1671 = vset.pattern.permute.xlu0 0
        %1672 = vperm.xlu0 %1671, %v1658
        %v1673 = vpop.permute.xlu0 %1672
        %v1675 = vsub.f32 %v1642, %v1668
        %v1676 = vsub.f32 %v1645, %v1673
        %v1677 = vmul.f32 %v1675, 1.442695
        %v1678 = vpow.pop %v1677
        %v1679 = vmul.f32 %v1676, 1.442695
        %v1680 = vpow.pop %v1679
        %s1681 = scalar_lea.vmem [#allocation4], 48
        %v1682 = vld [vmem:[%s1681] sm:$0xff]
        %v1683 = vld [vmem:[%s1681 + $0x8] sm:$0xff]
        %v1684 = vmul.f32 %v1662, %v1682
        %v1685 = vmul.f32 %v1664, %v1683
        %v1686 = vsel %vm790, %v1678, 0.0
        %1687 = vadd.xlane.f32.xlu0 %v1686
        %v1688 = vpop.xlane.xlu0 %1687
        %v1689 = vsel %vm790, %v1680, 0.0
        %1690 = vadd.xlane.f32.xlu0 %v1689
        %v1691 = vpop.xlane.xlu0 %1690
        %v1692 = vadd.f32 %v1684, %v1688
        %v1693 = vadd.f32 %v1685, %v1691
        %1694 = vst.msk [vmem:[%s1681] sm:$0xff] %vm833, %v1692
        %1695 = vst.msk [vmem:[%s1681 + $0x8] sm:$0xff] %vm833, %v1693
        %s1696 = scalar_lea.vmem [#allocation5], 48
        %v1697 = vld [vmem:[%s1696] sm:$0xff]
        %v1698 = vld [vmem:[%s1696 + $0x8] sm:$0xff]
        %1700 = vset.pattern.permute.xlu0 0
        %1701 = vperm.xlu0 %1700, %v1662
        %v1702 = vpop.permute.xlu0 %1701
        %1705 = vset.pattern.permute.xlu0 0
        %1706 = vperm.xlu0 %1705, %v1664
        %v1707 = vpop.permute.xlu0 %1706
        %v1709 = vmul.f32 %v1702, %v1697
        %v1710 = vmul.f32 %v1707, %v1698
        %v1711 = vpack.c.bf16 %v1680, %v1678
        %v1713 = vsel %vm790, %v1711, 0
        %1715 = vmatprep.subr.bf16.mxu0 0
        %1716 = vmatpush1.bf16.msra.mxu0 0
        %1717 = vmatprep.subr.bf16.mxu0 0
        %1718 = vmatpush1.bf16.msra.mxu0 0
        %1719 = vmatprep.subr.bf16.mxu0 0
        %1720 = vmatpush1.bf16.msra.mxu0 0
        %1721 = vmatprep.subr.bf16.mxu0 0
        %1722 = vmatpush1.bf16.msra.mxu0 0
        %1723 = vmatprep.subr.bf16.mxu0 0
        %1724 = vmatpush1.bf16.msra.mxu0 0
        %1725 = vmatprep.subr.bf16.mxu0 0
        %1726 = vmatpush1.bf16.msra.mxu0 0
        %1727 = vmatprep.subr.bf16.mxu0 0
        %1728 = vmatpush1.bf16.msra.mxu0 0
        %1729 = vmatprep.subr.bf16.mxu0 0
        %1730 = vmatpush1.bf16.msra.mxu0 %v1592
        %1731 = vmatprep.subr.bf16.mxu0 0
        %1732 = vmatpush2.bf16.msra.mxu0 0
        %1733 = vmatprep.subr.bf16.mxu0 0
        %1734 = vmatpush2.bf16.msra.mxu0 0
        %1735 = vmatprep.subr.bf16.mxu0 0
        %1736 = vmatpush2.bf16.msra.mxu0 0
        %1737 = vmatprep.subr.bf16.mxu0 0
        %1738 = vmatpush2.bf16.msra.mxu0 0
        %1739 = vmatprep.subr.bf16.mxu0 0
        %1740 = vmatpush2.bf16.msra.mxu0 0
        %1741 = vmatprep.subr.bf16.mxu0 0
        %1742 = vmatpush2.bf16.msra.mxu0 0
        %1743 = vmatprep.subr.bf16.mxu0 0
        %1744 = vmatpush2.bf16.msra.mxu0 0
        %1745 = vmatprep.subr.bf16.mxu0 0
        %1746 = vmatpush2.bf16.msra.mxu0 0
        %1747 = vmatprep.mubr.bf16.mxu0 0
        %1748 = vmatmul.mubr.bf16.gmra.mxu0 %v1713
        %v1749 = vpop.f32.mrf.mxu0
        %v1750 = vadd.f32 0.0, %v1749
        %v1751 = vpop.f32.mrf.mxu0
        %v1752 = vpop.f32.mrf.mxu0
        %v1753 = vadd.f32 0.0, %v1752
        %v1754 = vpop.f32.mrf.mxu0
        %1755 = vdwg.mxu0
        %v1756 = vadd.f32 %v1709, %v1750
        %v1757 = vadd.f32 %v1710, %v1753
        %1758 = vst.msk [vmem:[%s1696] sm:$0xff] %vm740, %v1756
        %1759 = vst.msk [vmem:[%s1696 + $0x8] sm:$0xff] %vm740, %v1757
        %1760 = vst.msk [vmem:[%s1648] sm:$0xff] %vm833, %v1657
        %1761 = vst.msk [vmem:[%s1648 + $0x8] sm:$0xff] %vm833, %v1658
        // Predicated region
        $region45: #{tpu_custom_call.1} parent=39 // pred_check
          %p1762 = pneg %p298
        $region46: #{tpu_custom_call.1} parent=39 // pred_check_branch
          %1764 = sbr.rel (%p1762) target = $region48
        $region47: #{tpu_custom_call.1} parent=39 // pred_region
          %v1765 = vld [vmem:[#allocation5] sm:$0xff]
          %v1766 = vld [vmem:[#allocation5 + $0x8] sm:$0xff]
          %v1767 = vld [vmem:[#allocation4] sm:$0xff]
          %v1768 = vld [vmem:[#allocation4 + $0x8] sm:$0xff]
          %1770 = vset.pattern.permute.xlu0 0
          %1771 = vperm.xlu0 %1770, %v1767
          %v1772 = vpop.permute.xlu0 %1771
          %1775 = vset.pattern.permute.xlu0 0
          %1776 = vperm.xlu0 %1775, %v1768
          %v1777 = vpop.permute.xlu0 %1776
          %v1779 = vrcp.pop %v1772
          %v1780 = vmul.f32 %v1765, %v1779
          %v1781 = vrcp.pop %v1777
          %v1782 = vmul.f32 %v1766, %v1781
          %v1783 = vld [vmem:[%s1122] sm:$0xff]
          %v1784 = vld [vmem:[%s1122 + $0x8] sm:$0xff]
          %v1785 = vld [vmem:[%s1107] sm:$0xff]
          %v1786 = vld [vmem:[%s1107 + $0x8] sm:$0xff]
          %1788 = vset.pattern.permute.xlu0 0
          %1789 = vperm.xlu0 %1788, %v1785
          %v1790 = vpop.permute.xlu0 %1789
          %1793 = vset.pattern.permute.xlu0 0
          %1794 = vperm.xlu0 %1793, %v1786
          %v1795 = vpop.permute.xlu0 %1794
          %v1797 = vrcp.pop %v1790
          %v1798 = vmul.f32 %v1783, %v1797
          %v1799 = vrcp.pop %v1795
          %v1800 = vmul.f32 %v1784, %v1799
          %v1801 = vld [vmem:[%s1409] sm:$0xff]
          %v1802 = vld [vmem:[%s1409 + $0x8] sm:$0xff]
          %v1803 = vld [vmem:[%s1394] sm:$0xff]
          %v1804 = vld [vmem:[%s1394 + $0x8] sm:$0xff]
          %1806 = vset.pattern.permute.xlu0 0
          %1807 = vperm.xlu0 %1806, %v1803
          %v1808 = vpop.permute.xlu0 %1807
          %1811 = vset.pattern.permute.xlu0 0
          %1812 = vperm.xlu0 %1811, %v1804
          %v1813 = vpop.permute.xlu0 %1812
          %v1815 = vrcp.pop %v1808
          %v1816 = vmul.f32 %v1801, %v1815
          %v1817 = vrcp.pop %v1813
          %v1818 = vmul.f32 %v1802, %v1817
          %v1819 = vld [vmem:[%s1696] sm:$0xff]
          %v1820 = vld [vmem:[%s1696 + $0x8] sm:$0xff]
          %v1821 = vld [vmem:[%s1681] sm:$0xff]
          %v1822 = vld [vmem:[%s1681 + $0x8] sm:$0xff]
          %1824 = vset.pattern.permute.xlu0 0
          %1825 = vperm.xlu0 %1824, %v1821
          %v1826 = vpop.permute.xlu0 %1825
          %1829 = vset.pattern.permute.xlu0 0
          %1830 = vperm.xlu0 %1829, %v1822
          %v1831 = vpop.permute.xlu0 %1830
          %v1833 = vrcp.pop %v1826
          %v1834 = vmul.f32 %v1819, %v1833
          %v1835 = vrcp.pop %v1831
          %v1836 = vmul.f32 %v1820, %v1835
          %1839 = vrot.lane.b32.xlu0 %v1798, 8
          %v1840 = vpop.permute.xlu0 %1839
          %1841 = vrot.lane.b32.xlu0 %v1800, 8
          %v1842 = vpop.permute.xlu0 %1841
          %1847 = vrot.lane.b32.xlu0 %v1816, 16
          %v1848 = vpop.permute.xlu0 %1847
          %1849 = vrot.lane.b32.xlu0 %v1818, 16
          %v1850 = vpop.permute.xlu0 %1849
          %1855 = vrot.lane.b32.xlu0 %v1834, 24
          %v1856 = vpop.permute.xlu0 %1855
          %1857 = vrot.lane.b32.xlu0 %v1836, 24
          %v1858 = vpop.permute.xlu0 %1857
          %v1861 = vsel %vm740, %v1780, %v1840
          %v1862 = vsel %vm740, %v1782, %v1842
          %v1863 = vsel %vm790, %v1861, %v1848
          %v1864 = vsel %vm790, %v1862, %v1850
          %vm1865 = vcmask 195584
          %v1866 = vsel %vm1865, %v1863, %v1856
          %v1867 = vsel %vm1865, %v1864, %v1858
          %1868 = vst.msk [vmem:[%s275] sm:$0xff] %vm629, %v1866
          %1869 = vst.msk [vmem:[%s275 + $0x8] sm:$0xff] %vm629, %v1867
        $region48: #{tpu_custom_call.1} parent=39 // pred_fallthru
          _
        %s1870 = sand.u32 %s167, 1
        %s1871 = scalar_lea.sflag [#allocation7], %s1870
        %s1872 = sand.u32 %s167, 1
        %s1873 = smul.addr %s1872, 16
        %s1874 = scalar_lea.vmem [#allocation6], %s1873
        // Predicated region
        $region49: #{tpu_custom_call.1} parent=39 // pred_check
          %p1875 = pneg %p177
        $region50: #{tpu_custom_call.1} parent=39 // pred_check_branch
          %1877 = sbr.rel (%p1875) target = $region52
        $region51: #{tpu_custom_call.1} parent=39 // pred_region
          %s1878 = smul.u32 2, %s25
          %s1880 = ssub.s32 256, 256
          %1881 = vsyncadd %s1871, %s1880
          %s1882 = smul.addr %s24, 2
          %s1883 = sadd.s32 %s1878, %s1882
          %s1884 = smul.addr %s1883, 128
          %s1885 = scalar_lea.hbm %s5, %s1884
          %s1886 = sshll.u32 %s1874, 4
          %s1887 = int_to_ptr.vmem [resolvable:$true] %s1886
          %1892 = dma.vmem_to_hbm [thread:$0]  %s1887, 256, %s1885, %s1871, 128, 128, 8
        $region52: #{tpu_custom_call.1} parent=39 // pred_fallthru
          _
      $region40: #{tpu_custom_call.1} parent=5 // pred_fallthru
        _
      %p1893 = scmp.le.s32.totalorder 2, %s14
      // Predicated region
      $region53: #{tpu_custom_call.1} parent=5 // pred_check
        %p1894 = pneg %p1893
      $region54: #{tpu_custom_call.1} parent=5 // pred_check_branch
        %1896 = sbr.rel (%p1894) target = $region56
      $region55: #{tpu_custom_call.1} parent=5 // pred_region
        %s1897 = ssub.s32 %s14, 2
        // Predicated region
        $region57: #{tpu_custom_call.1} parent=55 // pred_check
          %p1898 = pneg %p183
        $region58: #{tpu_custom_call.1} parent=55 // pred_check_branch
          %1900 = sbr.rel (%p1898) target = $region60
        $region59: #{tpu_custom_call.1} parent=55 // pred_region
          %s1901 = sand.u32 %s168, 1
          %s1902 = scalar_lea.sflag [#allocation7], %s1901
          %s1903 = sand.u32 %s168, 1
          %s1904 = smul.addr %s1903, 16
          %s1905 = scalar_lea.vmem [#allocation6], %s1904
          %1906 = dma.done %s1902, 256
        $region60: #{tpu_custom_call.1} parent=55 // pred_fallthru
          _
      $region56: #{tpu_custom_call.1} parent=5 // pred_fallthru
        _
    $region6: #{tpu_custom_call.1} parent=1 // loop_footer
      %s18 = sadd.s32 1, %s14
    $region7: #{tpu_custom_call.1} parent=1 // loop_footer_branch
      %13 = sbr.rel target = $region3
    $region8: #{tpu_custom_call.1} parent=1 // loop_exit
      _
    %1907 = vsyncpa [#allocation7], 1
    %s1908 = scalar_lea.sflag [#allocation7], 1
    %1909 = vsyncpa %s1908, 1

</llo_original>
